<compile_context>
chip_gen: v5e
topology: v5e:2x2
jax: 0.10.0
libtpu: 0.0.40
codegen_flags: <defaults>
</compile_context>

<pallas_src>
import jax
import jax.numpy as jnp
from jax.experimental import pallas as pl
from jax.experimental.pallas import tpu as pltpu

INPUT_SIZE = 13
HIDDEN1_SIZE = 1024
HIDDEN2_SIZE = 512
OUTPUT_SIZE = 3

OUT_PAD = 128    # fc3 weight columns padded 3 -> 128 (zero-filled) for a clean MXU matmul
TILE_B = 512     # batch tile; amortizes per-grid-step overhead, VMEM stays ~a few MiB
H1_CHUNK = 256   # HIDDEN1 slab width for the fused fc1->ReLU->fc2 accumulation


def _round_up(a, m):
    return ((a + m - 1) // m) * m


def mlp_kernel(x_ref, w1_ref, b1_ref, w2_ref, b2_ref, w3_ref, b3_ref, o_ref):
    # x arrives f32 (tile_b, 13); cast to bf16 on the VPU, MXU accumulates in f32.
    x = x_ref[...].astype(jnp.bfloat16)
    tb = x.shape[0]

    # fc1 + ReLU + partial fc2, chunked over the HIDDEN1 axis so only a (tb, H1_CHUNK)
    # slab of z1 is live at a time; accumulate the fc2 pre-activation in f32.
    z2 = jnp.zeros((tb, HIDDEN2_SIZE), jnp.float32)
    for c in range(0, HIDDEN1_SIZE, H1_CHUNK):
        z1_c = jnp.dot(x, w1_ref[:, c:c + H1_CHUNK],
                       preferred_element_type=jnp.float32) + b1_ref[:, c:c + H1_CHUNK]
        z1_c = jnp.maximum(z1_c, 0.0).astype(jnp.bfloat16)
        z2 = z2 + jnp.dot(z1_c, w2_ref[c:c + H1_CHUNK, :],
                          preferred_element_type=jnp.float32)

    z2 = jnp.maximum(z2 + b2_ref[...], 0.0).astype(jnp.bfloat16)
    z3 = jnp.dot(z2, w3_ref[...], preferred_element_type=jnp.float32) + b3_ref[...]
    # Only the first OUTPUT_SIZE columns are real; the rest are zero-padded weight columns.
    o_ref[...] = z3[:, :OUTPUT_SIZE].astype(o_ref.dtype)


@jax.jit
def example_nn_forward(x, params):
    """x: (B, INPUT_SIZE) float32.  params: bf16 weights (w3 padded to OUT_PAD) + f32 biases."""
    w1, b1, w2, b2, w3, b3 = params
    B = x.shape[0]

    # Only pad the batch rows (and only when B is not already a multiple of the tile).
    b_pad = _round_up(max(B, 1), 8)
    tile_b = min(TILE_B, b_pad)
    b_pad = _round_up(b_pad, tile_b)
    if b_pad != B:
        x_in = jnp.zeros((b_pad, INPUT_SIZE), x.dtype).at[:B].set(x)
    else:
        x_in = x

    grid = (b_pad // tile_b,)

    bytes_accessed = (
        b_pad * INPUT_SIZE * 4
        + w1.size * 2 + w2.size * 2 + w3.size * 2
        + b1.size * 4 + b2.size * 4 + b3.size * 4
        + b_pad * OUTPUT_SIZE * 4
    )
    flops = 2 * b_pad * (INPUT_SIZE * HIDDEN1_SIZE
                         + HIDDEN1_SIZE * HIDDEN2_SIZE
                         + HIDDEN2_SIZE * OUT_PAD)

    out = pl.pallas_call(
        mlp_kernel,
        out_shape=jax.ShapeDtypeStruct((b_pad, OUTPUT_SIZE), jnp.float32),
        grid=grid,
        in_specs=[
            pl.BlockSpec((tile_b, INPUT_SIZE), lambda i: (i, 0)),        # x streams per tile
            pl.BlockSpec((INPUT_SIZE, HIDDEN1_SIZE), lambda i: (0, 0)),  # weights stay resident
            pl.BlockSpec((1, HIDDEN1_SIZE), lambda i: (0, 0)),
            pl.BlockSpec((HIDDEN1_SIZE, HIDDEN2_SIZE), lambda i: (0, 0)),
            pl.BlockSpec((1, HIDDEN2_SIZE), lambda i: (0, 0)),
            pl.BlockSpec((HIDDEN2_SIZE, OUT_PAD), lambda i: (0, 0)),
            pl.BlockSpec((1, OUT_PAD), lambda i: (0, 0)),
        ],
        out_specs=pl.BlockSpec((tile_b, OUTPUT_SIZE), lambda i: (i, 0)),
        compiler_params=pltpu.CompilerParams(
            dimension_semantics=("parallel",),
            vmem_limit_bytes=32 * 1024 * 1024),
        cost_estimate=pl.CostEstimate(
            flops=flops, transcendentals=0, bytes_accessed=bytes_accessed),
    )(x_in, w1, b1, w2, b2, w3, b3)

    if b_pad != B:
        out = out[:B]
    return out


def init_params_f32(key):
    """PyTorch nn.Linear-style init (uniform +-1/sqrt(fan_in)), stored as (in, out) f32."""
    def linear(k, fan_in, fan_out):
        kw, kb = jax.random.split(k)
        bound = 1.0 / jnp.sqrt(jnp.float32(fan_in))
        w = jax.random.uniform(kw, (fan_in, fan_out), jnp.float32, -bound, bound)
        b = jax.random.uniform(kb, (1, fan_out), jnp.float32, -bound, bound)
        return w, b

    k1, k2, k3 = jax.random.split(key, 3)
    w1, b1 = linear(k1, INPUT_SIZE, HIDDEN1_SIZE)
    w2, b2 = linear(k2, HIDDEN1_SIZE, HIDDEN2_SIZE)
    w3, b3 = linear(k3, HIDDEN2_SIZE, OUTPUT_SIZE)
    return (w1, b1, w2, b2, w3, b3)


def pack_params(params_f32):
    """Cast weights to bf16 and zero-pad fc3 output columns 3 -> OUT_PAD."""
    w1, b1, w2, b2, w3, b3 = params_f32
    w3p = jnp.zeros((HIDDEN2_SIZE, OUT_PAD), jnp.float32).at[:, :OUTPUT_SIZE].set(w3)
    b3p = jnp.zeros((1, OUT_PAD), jnp.float32).at[:, :OUTPUT_SIZE].set(b3)
    return (w1.astype(jnp.bfloat16), b1,
            w2.astype(jnp.bfloat16), b2,
            w3p.astype(jnp.bfloat16), b3p)


def reference_forward_quant(x, params):
    """Pure-JAX reference applying the same bf16 quantization as the kernel."""
    w1, b1, w2, b2, w3, b3 = params
    xb = x.astype(jnp.bfloat16)
    z1 = jnp.maximum(jnp.dot(xb, w1, preferred_element_type=jnp.float32) + b1, 0.0)
    z1 = z1.astype(jnp.bfloat16)
    z2 = jnp.maximum(jnp.dot(z1, w2, preferred_element_type=jnp.float32) + b2, 0.0)
    z2 = z2.astype(jnp.bfloat16)
    z3 = jnp.dot(z2, w3, preferred_element_type=jnp.float32) + b3
    return z3[:, :OUTPUT_SIZE]


def reference_forward_f32(x, params_f32):
    """The original ExampleNN forward in full f32."""
    w1, b1, w2, b2, w3, b3 = params_f32
    z1 = jnp.maximum(x @ w1 + b1, 0.0)
    z2 = jnp.maximum(z1 @ w2 + b2, 0.0)
    return z2 @ w3 + b3


if __name__ == "__main__":
    key = jax.random.PRNGKey(0)
    kx, kp = jax.random.split(key)
    batch = 8
    x = jax.random.normal(kx, (batch, INPUT_SIZE), jnp.float32)

    params_f32 = init_params_f32(kp)
    params = pack_params(params_f32)

    out = example_nn_forward(x, params)
    out = jax.block_until_ready(out)
    assert out.shape == (batch, OUTPUT_SIZE)

    # Tight check against a reference with identical bf16 quantization.
    ref_q = reference_forward_quant(x, params)
    assert jnp.allclose(out, ref_q, atol=2e-3, rtol=2e-3), (
        f"max abs diff vs quantized ref = {jnp.max(jnp.abs(out - ref_q))}")

    # Loose check against the true f32 ExampleNN math (bf16 weights/activations tradeoff).
    ref_f = reference_forward_f32(x, params_f32)
    assert jnp.allclose(out, ref_f, atol=5e-2, rtol=5e-2), (
        f"max abs diff vs f32 ref = {jnp.max(jnp.abs(out - ref_f))}")

    print("KERNEL_OK")
</pallas_src>

<mosaic_0001>
module attributes {stable_mosaic.version = 11 : i64} {
  func.func @mlp_kernel(%arg0: i32, %arg1: memref<8x13xf32, #tpu.memory_space<vmem>>, %arg2: memref<13x1024xbf16, #tpu.memory_space<vmem>>, %arg3: memref<1x1024xf32, #tpu.memory_space<vmem>>, %arg4: memref<1024x512xbf16, #tpu.memory_space<vmem>>, %arg5: memref<1x512xf32, #tpu.memory_space<vmem>>, %arg6: memref<512x128xbf16, #tpu.memory_space<vmem>>, %arg7: memref<1x128xf32, #tpu.memory_space<vmem>>, %arg8: memref<8x3xf32, #tpu.memory_space<vmem>>) attributes {dimension_semantics = [#tpu.dimension_semantics<parallel>], iteration_bounds = array<i64: 1>, scalar_prefetch = 0 : i64, scratch_operands = 0 : i64, tpu.core_type = #tpu.core_type<tc>, window_params = [{transform_indices = @transform_0, window_bounds = array<i64: 8, 13>}, {pipeline_mode = #tpu.pipeline_mode<synchronous>, transform_indices = @transform_1, window_bounds = array<i64: 13, 1024>}, {pipeline_mode = #tpu.pipeline_mode<synchronous>, transform_indices = @transform_2, window_bounds = array<i64: 1, 1024>}, {pipeline_mode = #tpu.pipeline_mode<synchronous>, transform_indices = @transform_3, window_bounds = array<i64: 1024, 512>}, {pipeline_mode = #tpu.pipeline_mode<synchronous>, transform_indices = @transform_4, window_bounds = array<i64: 1, 512>}, {pipeline_mode = #tpu.pipeline_mode<synchronous>, transform_indices = @transform_5, window_bounds = array<i64: 512, 128>}, {pipeline_mode = #tpu.pipeline_mode<synchronous>, transform_indices = @transform_6, window_bounds = array<i64: 1, 128>}, {transform_indices = @transform_7, window_bounds = array<i64: 8, 3>}]} {
    %c0 = arith.constant 0 : index
    %c0_0 = arith.constant 0 : index
    %0 = vector.load %arg1[%c0, %c0_0] : memref<8x13xf32, #tpu.memory_space<vmem>>, vector<8x13xf32>
    %1 = arith.truncf %0 : vector<8x13xf32> to vector<8x13xbf16>
    %cst = arith.constant 0.000000e+00 : f32
    %2 = vector.broadcast %cst : f32 to vector<8x512xf32>
    %c0_1 = arith.constant 0 : index
    %c0_2 = arith.constant 0 : index
    %3 = vector.load %arg2[%c0_1, %c0_2] : memref<13x1024xbf16, #tpu.memory_space<vmem>>, vector<13x256xbf16>
    %cst_3 = arith.constant dense<0.000000e+00> : vector<8x256xf32>
    %4 = tpu.matmul %1, %3, %cst_3 {dimension_numbers = #tpu.dot_dimension_numbers<[1], [0], [0], [1], [0, 0, 1, 1], [], []>} : vector<8x13xbf16>, vector<13x256xbf16>, vector<8x256xf32> -> vector<8x256xf32>
    %c0_4 = arith.constant 0 : index
    %c0_5 = arith.constant 0 : index
    %5 = vector.load %arg3[%c0_4, %c0_5] : memref<1x1024xf32, #tpu.memory_space<vmem>>, vector<1x256xf32>
    %6 = vector.broadcast %5 : vector<1x256xf32> to vector<8x256xf32>
    %7 = arith.addf %4, %6 : vector<8x256xf32>
    %cst_6 = arith.constant 0.000000e+00 : f32
    %8 = vector.broadcast %cst_6 : f32 to vector<8x256xf32>
    %9 = arith.maximumf %7, %8 : vector<8x256xf32>
    %10 = arith.truncf %9 : vector<8x256xf32> to vector<8x256xbf16>
    %c0_7 = arith.constant 0 : index
    %c0_8 = arith.constant 0 : index
    %11 = vector.load %arg4[%c0_7, %c0_8] : memref<1024x512xbf16, #tpu.memory_space<vmem>>, vector<256x512xbf16>
    %cst_9 = arith.constant dense<0.000000e+00> : vector<8x512xf32>
    %12 = tpu.matmul %10, %11, %cst_9 {dimension_numbers = #tpu.dot_dimension_numbers<[1], [0], [0], [1], [0, 0, 1, 1], [], []>} : vector<8x256xbf16>, vector<256x512xbf16>, vector<8x512xf32> -> vector<8x512xf32>
    %13 = arith.addf %2, %12 : vector<8x512xf32>
    %c0_10 = arith.constant 0 : index
    %c256 = arith.constant 256 : index
    %14 = vector.load %arg2[%c0_10, %c256] : memref<13x1024xbf16, #tpu.memory_space<vmem>>, vector<13x256xbf16>
    %cst_11 = arith.constant dense<0.000000e+00> : vector<8x256xf32>
    %15 = tpu.matmul %1, %14, %cst_11 {dimension_numbers = #tpu.dot_dimension_numbers<[1], [0], [0], [1], [0, 0, 1, 1], [], []>} : vector<8x13xbf16>, vector<13x256xbf16>, vector<8x256xf32> -> vector<8x256xf32>
    %c0_12 = arith.constant 0 : index
    %c256_13 = arith.constant 256 : index
    %16 = vector.load %arg3[%c0_12, %c256_13] : memref<1x1024xf32, #tpu.memory_space<vmem>>, vector<1x256xf32>
    %17 = vector.broadcast %16 : vector<1x256xf32> to vector<8x256xf32>
    %18 = arith.addf %15, %17 : vector<8x256xf32>
    %cst_14 = arith.constant 0.000000e+00 : f32
    %19 = vector.broadcast %cst_14 : f32 to vector<8x256xf32>
    %20 = arith.maximumf %18, %19 : vector<8x256xf32>
    %21 = arith.truncf %20 : vector<8x256xf32> to vector<8x256xbf16>
    %c256_15 = arith.constant 256 : index
    %c0_16 = arith.constant 0 : index
    %22 = vector.load %arg4[%c256_15, %c0_16] : memref<1024x512xbf16, #tpu.memory_space<vmem>>, vector<256x512xbf16>
    %cst_17 = arith.constant dense<0.000000e+00> : vector<8x512xf32>
    %23 = tpu.matmul %21, %22, %cst_17 {dimension_numbers = #tpu.dot_dimension_numbers<[1], [0], [0], [1], [0, 0, 1, 1], [], []>} : vector<8x256xbf16>, vector<256x512xbf16>, vector<8x512xf32> -> vector<8x512xf32>
    %24 = arith.addf %13, %23 : vector<8x512xf32>
    %c0_18 = arith.constant 0 : index
    %c512 = arith.constant 512 : index
    %25 = vector.load %arg2[%c0_18, %c512] : memref<13x1024xbf16, #tpu.memory_space<vmem>>, vector<13x256xbf16>
    %cst_19 = arith.constant dense<0.000000e+00> : vector<8x256xf32>
    %26 = tpu.matmul %1, %25, %cst_19 {dimension_numbers = #tpu.dot_dimension_numbers<[1], [0], [0], [1], [0, 0, 1, 1], [], []>} : vector<8x13xbf16>, vector<13x256xbf16>, vector<8x256xf32> -> vector<8x256xf32>
    %c0_20 = arith.constant 0 : index
    %c512_21 = arith.constant 512 : index
    %27 = vector.load %arg3[%c0_20, %c512_21] : memref<1x1024xf32, #tpu.memory_space<vmem>>, vector<1x256xf32>
    %28 = vector.broadcast %27 : vector<1x256xf32> to vector<8x256xf32>
    %29 = arith.addf %26, %28 : vector<8x256xf32>
    %cst_22 = arith.constant 0.000000e+00 : f32
    %30 = vector.broadcast %cst_22 : f32 to vector<8x256xf32>
    %31 = arith.maximumf %29, %30 : vector<8x256xf32>
    %32 = arith.truncf %31 : vector<8x256xf32> to vector<8x256xbf16>
    %c512_23 = arith.constant 512 : index
    %c0_24 = arith.constant 0 : index
    %33 = vector.load %arg4[%c512_23, %c0_24] : memref<1024x512xbf16, #tpu.memory_space<vmem>>, vector<256x512xbf16>
    %cst_25 = arith.constant dense<0.000000e+00> : vector<8x512xf32>
    %34 = tpu.matmul %32, %33, %cst_25 {dimension_numbers = #tpu.dot_dimension_numbers<[1], [0], [0], [1], [0, 0, 1, 1], [], []>} : vector<8x256xbf16>, vector<256x512xbf16>, vector<8x512xf32> -> vector<8x512xf32>
    %35 = arith.addf %24, %34 : vector<8x512xf32>
    %c0_26 = arith.constant 0 : index
    %c768 = arith.constant 768 : index
    %36 = vector.load %arg2[%c0_26, %c768] : memref<13x1024xbf16, #tpu.memory_space<vmem>>, vector<13x256xbf16>
    %cst_27 = arith.constant dense<0.000000e+00> : vector<8x256xf32>
    %37 = tpu.matmul %1, %36, %cst_27 {dimension_numbers = #tpu.dot_dimension_numbers<[1], [0], [0], [1], [0, 0, 1, 1], [], []>} : vector<8x13xbf16>, vector<13x256xbf16>, vector<8x256xf32> -> vector<8x256xf32>
    %c0_28 = arith.constant 0 : index
    %c768_29 = arith.constant 768 : index
    %38 = vector.load %arg3[%c0_28, %c768_29] : memref<1x1024xf32, #tpu.memory_space<vmem>>, vector<1x256xf32>
    %39 = vector.broadcast %38 : vector<1x256xf32> to vector<8x256xf32>
    %40 = arith.addf %37, %39 : vector<8x256xf32>
    %cst_30 = arith.constant 0.000000e+00 : f32
    %41 = vector.broadcast %cst_30 : f32 to vector<8x256xf32>
    %42 = arith.maximumf %40, %41 : vector<8x256xf32>
    %43 = arith.truncf %42 : vector<8x256xf32> to vector<8x256xbf16>
    %c768_31 = arith.constant 768 : index
    %c0_32 = arith.constant 0 : index
    %44 = vector.load %arg4[%c768_31, %c0_32] : memref<1024x512xbf16, #tpu.memory_space<vmem>>, vector<256x512xbf16>
    %cst_33 = arith.constant dense<0.000000e+00> : vector<8x512xf32>
    %45 = tpu.matmul %43, %44, %cst_33 {dimension_numbers = #tpu.dot_dimension_numbers<[1], [0], [0], [1], [0, 0, 1, 1], [], []>} : vector<8x256xbf16>, vector<256x512xbf16>, vector<8x512xf32> -> vector<8x512xf32>
    %46 = arith.addf %35, %45 : vector<8x512xf32>
    %c0_34 = arith.constant 0 : index
    %c0_35 = arith.constant 0 : index
    %47 = vector.load %arg5[%c0_34, %c0_35] : memref<1x512xf32, #tpu.memory_space<vmem>>, vector<1x512xf32>
    %48 = vector.broadcast %47 : vector<1x512xf32> to vector<8x512xf32>
    %49 = arith.addf %46, %48 : vector<8x512xf32>
    %cst_36 = arith.constant 0.000000e+00 : f32
    %50 = vector.broadcast %cst_36 : f32 to vector<8x512xf32>
    %51 = arith.maximumf %49, %50 : vector<8x512xf32>
    %52 = arith.truncf %51 : vector<8x512xf32> to vector<8x512xbf16>
    %c0_37 = arith.constant 0 : index
    %c0_38 = arith.constant 0 : index
    %53 = vector.load %arg6[%c0_37, %c0_38] : memref<512x128xbf16, #tpu.memory_space<vmem>>, vector<512x128xbf16>
    %cst_39 = arith.constant dense<0.000000e+00> : vector<8x128xf32>
    %54 = tpu.matmul %52, %53, %cst_39 {dimension_numbers = #tpu.dot_dimension_numbers<[1], [0], [0], [1], [0, 0, 1, 1], [], []>} : vector<8x512xbf16>, vector<512x128xbf16>, vector<8x128xf32> -> vector<8x128xf32>
    %c0_40 = arith.constant 0 : index
    %c0_41 = arith.constant 0 : index
    %55 = vector.load %arg7[%c0_40, %c0_41] : memref<1x128xf32, #tpu.memory_space<vmem>>, vector<1x128xf32>
    %56 = vector.broadcast %55 : vector<1x128xf32> to vector<8x128xf32>
    %57 = arith.addf %54, %56 : vector<8x128xf32>
    %58 = vector.extract_strided_slice %57 {offsets = [0, 0], sizes = [8, 3], strides = [1, 1]} : vector<8x128xf32> to vector<8x3xf32>
    %c0_42 = arith.constant 0 : index
    %c0_43 = arith.constant 0 : index
    %59 = vector.load %arg8[%c0_42, %c0_43] : memref<8x3xf32, #tpu.memory_space<vmem>>, vector<8x3xf32>
    tpu.vector_store %arg8[%c0_42, %c0_43], %58 {strides = array<i32>} : memref<8x3xf32, #tpu.memory_space<vmem>>, vector<8x3xf32>,
    return
  }
  func.func @transform_0(%arg0: i32) -> (i32, i32) {
    %c0_i32 = arith.constant 0 : i32
    %c0_i32_0 = arith.constant 0 : i32
    return %arg0, %c0_i32 : i32, i32
  }
  func.func @transform_1(%arg0: i32) -> (i32, i32) {
    %c0_i32 = arith.constant 0 : i32
    %c0_i32_0 = arith.constant 0 : i32
    %c0_i32_1 = arith.constant 0 : i32
    return %c0_i32, %c0_i32_0 : i32, i32
  }
  func.func @transform_2(%arg0: i32) -> (i32, i32) {
    %c0_i32 = arith.constant 0 : i32
    %c0_i32_0 = arith.constant 0 : i32
    %c0_i32_1 = arith.constant 0 : i32
    return %c0_i32, %c0_i32_0 : i32, i32
  }
  func.func @transform_3(%arg0: i32) -> (i32, i32) {
    %c0_i32 = arith.constant 0 : i32
    %c0_i32_0 = arith.constant 0 : i32
    %c0_i32_1 = arith.constant 0 : i32
    return %c0_i32, %c0_i32_0 : i32, i32
  }
  func.func @transform_4(%arg0: i32) -> (i32, i32) {
    %c0_i32 = arith.constant 0 : i32
    %c0_i32_0 = arith.constant 0 : i32
    %c0_i32_1 = arith.constant 0 : i32
    return %c0_i32, %c0_i32_0 : i32, i32
  }
  func.func @transform_5(%arg0: i32) -> (i32, i32) {
    %c0_i32 = arith.constant 0 : i32
    %c0_i32_0 = arith.constant 0 : i32
    %c0_i32_1 = arith.constant 0 : i32
    return %c0_i32, %c0_i32_0 : i32, i32
  }
  func.func @transform_6(%arg0: i32) -> (i32, i32) {
    %c0_i32 = arith.constant 0 : i32
    %c0_i32_0 = arith.constant 0 : i32
    %c0_i32_1 = arith.constant 0 : i32
    return %c0_i32, %c0_i32_0 : i32, i32
  }
  func.func @transform_7(%arg0: i32) -> (i32, i32) {
    %c0_i32 = arith.constant 0 : i32
    %c0_i32_0 = arith.constant 0 : i32
    return %arg0, %c0_i32 : i32, i32
  }
}

</mosaic_0001>

<llo_original>
// kernel: example_nn_forward.1
$region0: #{example_nn_forward.1}
  #allocation0 [shape = 'u32[]', space=smem, size = 0x4, offset = 0x4, fixed_abs, tag = 'smem constant byte address 0x4 - core index']
  #allocation1 [shape = 'u32[72,128]{1,0:T(1,128)}', space=vmem, size = 0x9000, scoped, tag = 'internal scratch']
  %s0 = inlined_call_operand.hbm [shape: f32[8,13], index: 0, kind: input, shape index: {}]
  %s1 = inlined_call_operand.hbm [shape: bf16[13,1024], index: 1, kind: input, shape index: {}]
  %s2 = inlined_call_operand.hbm [shape: f32[1,1024], index: 2, kind: input, shape index: {}]
  %s3 = inlined_call_operand.hbm [shape: bf16[1024,512], index: 3, kind: input, shape index: {}]
  %s4 = inlined_call_operand.hbm [shape: f32[1,512], index: 4, kind: input, shape index: {}]
  %s5 = inlined_call_operand.hbm [shape: bf16[512,128], index: 5, kind: input, shape index: {}]
  %s6 = inlined_call_operand.vmem [shape: f32[1,128], index: 6, kind: input, shape index: {}]
  %s7 = inlined_call_operand.vmem [shape: f32[8,3], index: 7, kind: output, shape index: {}]
  %s8 = sld [smem:[#allocation0]]
  $region62: #{example_nn_forward.1} parent=0
    _
  %s10 = ssub.s32 1, %s8
  %s11 = scalar_select 0, %s10, %s8
  $region1: #{example_nn_forward.1} parent=0
    #allocation2 [shape = 'u8[4096]{0}', space=vmem, size = 0x1000, scoped, tag = 'input window, operand 0, single buffered']
    #allocation3 [shape = 's32[1]{0}', space=sflag, size = 0x4, scoped, tag = 'scoped memory for example_nn_forward.1']
    #allocation4 [shape = 'u8[32768]{0}', space=vmem, size = 0x8000, scoped, tag = 'input window, operand 1, single buffered']
    #allocation5 [shape = 's32[1]{0}', space=sflag, size = 0x4, scoped, tag = 'scoped memory for example_nn_forward.1']
    #allocation6 [shape = 'u8[4096]{0}', space=vmem, size = 0x1000, scoped, tag = 'input window, operand 2, single buffered']
    #allocation7 [shape = 'u8[1048576]{0}', space=vmem, size = 0x100000, scoped, tag = 'input window, operand 3, single buffered']
    #allocation8 [shape = 's32[1]{0}', space=sflag, size = 0x4, scoped, tag = 'scoped memory for example_nn_forward.1']
    #allocation9 [shape = 'u8[2048]{0}', space=vmem, size = 0x800, scoped, tag = 'input window, operand 4, single buffered']
    #allocation10 [shape = 'u8[131072]{0}', space=vmem, size = 0x20000, scoped, tag = 'input window, operand 5, single buffered']
    #allocation11 [shape = 's32[1]{0}', space=sflag, size = 0x4, scoped, tag = 'scoped memory for example_nn_forward.1']
    %12 = vsyncpa [#allocation3], 0
    %13 = vsyncpa [#allocation5], 0
    %14 = vsyncpa [#allocation8], 0
    %15 = vsyncpa [#allocation11], 0
    // Predicated region
    $region2: #{example_nn_forward.1} parent=1 // pred_check
      _
    $region3: #{example_nn_forward.1} parent=1 // pred_check_branch
      %17 = sbr.rel (0) target = $region5
    $region4: #{example_nn_forward.1} parent=1 // pred_region
      %19 = vsyncadd [#allocation3], 0
      %s21 = sshll.u32 %s0, 4
      %s22 = int_to_ptr.hbm [resolvable:$true] %s21
      %s23 = sshll.u32 [#allocation2], 4
      %s24 = int_to_ptr.vmem [resolvable:$true] %s23
      %26 = dma.hbm_to_vmem [thread:$0]  %s22, 128, %s24, [#allocation3]
    $region5: #{example_nn_forward.1} parent=1 // pred_fallthru
      _
    // Predicated region
    $region6: #{example_nn_forward.1} parent=1 // pred_check
      _
    $region7: #{example_nn_forward.1} parent=1 // pred_check_branch
      %28 = sbr.rel (0) target = $region9
    $region8: #{example_nn_forward.1} parent=1 // pred_region
      %30 = vsyncadd [#allocation5], 0
      %s31 = sshll.u32 %s1, 4
      %s32 = int_to_ptr.hbm [resolvable:$true] %s31
      %s33 = sshll.u32 [#allocation4], 4
      %s34 = int_to_ptr.vmem [resolvable:$true] %s33
      %39 = dma.hbm_to_vmem [thread:$0]  %s32, 1024, %s34, [#allocation5], 512, 512, 32
    $region9: #{example_nn_forward.1} parent=1 // pred_fallthru
      _
    // Predicated region
    $region10: #{example_nn_forward.1} parent=1 // pred_check
      _
    $region11: #{example_nn_forward.1} parent=1 // pred_check_branch
      %41 = sbr.rel (0) target = $region13
    $region12: #{example_nn_forward.1} parent=1 // pred_region
      %43 = vsyncadd [#allocation5], 0
      %s45 = sshll.u32 %s2, 4
      %s46 = int_to_ptr.hbm [resolvable:$true] %s45
      %s47 = sshll.u32 [#allocation6], 4
      %s48 = int_to_ptr.vmem [resolvable:$true] %s47
      %50 = dma.hbm_to_vmem [thread:$0]  %s46, 128, %s48, [#allocation5]
    $region13: #{example_nn_forward.1} parent=1 // pred_fallthru
      _
    // Predicated region
    $region14: #{example_nn_forward.1} parent=1 // pred_check
      _
    $region15: #{example_nn_forward.1} parent=1 // pred_check_branch
      %52 = sbr.rel (0) target = $region17
    $region16: #{example_nn_forward.1} parent=1 // pred_region
      %54 = vsyncadd [#allocation8], 0
      %s55 = sshll.u32 %s3, 4
      %s56 = int_to_ptr.hbm [resolvable:$true] %s55
      %s57 = sshll.u32 [#allocation7], 4
      %s58 = int_to_ptr.vmem [resolvable:$true] %s57
      %63 = dma.hbm_to_vmem [thread:$0]  %s56, 32768, %s58, [#allocation8], 256, 256, 16
    $region17: #{example_nn_forward.1} parent=1 // pred_fallthru
      _
    // Predicated region
    $region18: #{example_nn_forward.1} parent=1 // pred_check
      _
    $region19: #{example_nn_forward.1} parent=1 // pred_check_branch
      %65 = sbr.rel (0) target = $region21
    $region20: #{example_nn_forward.1} parent=1 // pred_region
      %67 = vsyncadd [#allocation8], 0
      %s69 = sshll.u32 %s4, 4
      %s70 = int_to_ptr.hbm [resolvable:$true] %s69
      %s71 = sshll.u32 [#allocation9], 4
      %s72 = int_to_ptr.vmem [resolvable:$true] %s71
      %74 = dma.hbm_to_vmem [thread:$0]  %s70, 64, %s72, [#allocation8]
    $region21: #{example_nn_forward.1} parent=1 // pred_fallthru
      _
    // Predicated region
    $region22: #{example_nn_forward.1} parent=1 // pred_check
      _
    $region23: #{example_nn_forward.1} parent=1 // pred_check_branch
      %76 = sbr.rel (0) target = $region25
    $region24: #{example_nn_forward.1} parent=1 // pred_region
      %78 = vsyncadd [#allocation11], 0
      %s79 = sshll.u32 %s5, 4
      %s80 = int_to_ptr.hbm [resolvable:$true] %s79
      %s81 = sshll.u32 [#allocation10], 4
      %s82 = int_to_ptr.vmem [resolvable:$true] %s81
      %87 = dma.hbm_to_vmem [thread:$0]  %s80, 4096, %s82, [#allocation11], 64, 64, 4
    $region25: #{example_nn_forward.1} parent=1 // pred_fallthru
      _
    // Predicated region
    $region26: #{example_nn_forward.1} parent=1 // pred_check
      _
    $region27: #{example_nn_forward.1} parent=1 // pred_check_branch
      %89 = sbr.rel (0) target = $region29
    $region28: #{example_nn_forward.1} parent=1 // pred_region
      _
    $region29: #{example_nn_forward.1} parent=1 // pred_fallthru
      _
    // Predicated region
    $region30: #{example_nn_forward.1} parent=1 // pred_check
      _
    $region31: #{example_nn_forward.1} parent=1 // pred_check_branch
      %91 = sbr.rel (0) target = $region33
    $region32: #{example_nn_forward.1} parent=1 // pred_region
      %93 = dma.done [#allocation3], 128
    $region33: #{example_nn_forward.1} parent=1 // pred_fallthru
      _
    // Predicated region
    $region34: #{example_nn_forward.1} parent=1 // pred_check
      _
    $region35: #{example_nn_forward.1} parent=1 // pred_check_branch
      %95 = sbr.rel (0) target = $region37
    $region36: #{example_nn_forward.1} parent=1 // pred_region
      %97 = dma.done [#allocation5], 1024
    $region37: #{example_nn_forward.1} parent=1 // pred_fallthru
      _
    // Predicated region
    $region38: #{example_nn_forward.1} parent=1 // pred_check
      _
    $region39: #{example_nn_forward.1} parent=1 // pred_check_branch
      %99 = sbr.rel (0) target = $region41
    $region40: #{example_nn_forward.1} parent=1 // pred_region
      %101 = dma.done [#allocation5], 128
    $region41: #{example_nn_forward.1} parent=1 // pred_fallthru
      _
    // Predicated region
    $region42: #{example_nn_forward.1} parent=1 // pred_check
      _
    $region43: #{example_nn_forward.1} parent=1 // pred_check_branch
      %103 = sbr.rel (0) target = $region45
    $region44: #{example_nn_forward.1} parent=1 // pred_region
      %105 = dma.done [#allocation8], 32768
    $region45: #{example_nn_forward.1} parent=1 // pred_fallthru
      _
    // Predicated region
    $region46: #{example_nn_forward.1} parent=1 // pred_check
      _
    $region47: #{example_nn_forward.1} parent=1 // pred_check_branch
      %107 = sbr.rel (0) target = $region49
    $region48: #{example_nn_forward.1} parent=1 // pred_region
      %109 = dma.done [#allocation8], 64
    $region49: #{example_nn_forward.1} parent=1 // pred_fallthru
      _
    // Predicated region
    $region50: #{example_nn_forward.1} parent=1 // pred_check
      _
    $region51: #{example_nn_forward.1} parent=1 // pred_check_branch
      %111 = sbr.rel (0) target = $region53
    $region52: #{example_nn_forward.1} parent=1 // pred_region
      %113 = dma.done [#allocation11], 4096
    $region53: #{example_nn_forward.1} parent=1 // pred_fallthru
      _
    %v115 = vld [vmem:[#allocation2] sm:$0xff]
    %v116 = vpack.c.bf16 %v115, %v115
    %v117 = vld [vmem:[#allocation4] sm:$0xff]
    %v118 = vld [vmem:[#allocation4 + $0x20] sm:$0x77]
    %v119 = vld [vmem:[#allocation6] sm:$0x3]
    %v121 = vperm.slane %v119, 0
    %v122 = vperm.slane %v119, 1
    %v127 = vunpack.c.l.b16 %v117
    %v128 = vunpack.c.h.b16 %v117
    %v129 = vunpack.c.l.b16 %v118
    %v130 = vunpack.c.h.b16 %v118
    %v131 = vpack.c.b16 %v129, %v127
    %v132 = vpack.c.b16 %v130, %v128
    %vm133 = vcmask 105472
    %v135 = vsel %vm133, %v116, 0
    %vm137 = vcmask 1045504
    %vm138 = vcmask 1046528
    %v139 = vsel %vm137, 4294967295, 65535
    %v140 = vsel %vm138, %v139, 0
    %v142 = vand.u32 %v131, %v140
    %v145 = vand.u32 %v132, %v140
    %147 = vmatpush.bf16.msra.mxu0 0
    %148 = vmatpush.bf16.msra.mxu0 0
    %149 = vmatpush.bf16.msra.mxu0 0
    %150 = vmatpush.bf16.msra.mxu0 0
    %151 = vmatpush.bf16.msra.mxu0 0
    %152 = vmatpush.bf16.msra.mxu0 0
    %153 = vmatpush.bf16.msra.mxu0 0
    %154 = vmatpush.bf16.msra.mxu0 %v142
    %155 = vmatmul.bf16.gmra.mxu0 %v135
    %v156 = vpop.f32.mrf.mxu0
    %v157 = vadd.f32 %v121, %v156
    %v158 = vpop.f32.mrf.mxu0
    %159 = vdwg.mxu0
    %160 = vmatpush.bf16.msra.mxu0 0
    %161 = vmatpush.bf16.msra.mxu0 0
    %162 = vmatpush.bf16.msra.mxu0 0
    %163 = vmatpush.bf16.msra.mxu0 0
    %164 = vmatpush.bf16.msra.mxu0 0
    %165 = vmatpush.bf16.msra.mxu0 0
    %166 = vmatpush.bf16.msra.mxu0 0
    %167 = vmatpush.bf16.msra.mxu0 %v145
    %168 = vmatmul.bf16.gmra.mxu0 %v135
    %v169 = vpop.f32.mrf.mxu0
    %v170 = vadd.f32 %v122, %v169
    %v171 = vpop.f32.mrf.mxu0
    %172 = vdwg.mxu0
    %v173 = vmax.f32 %v157, 0.0
    %v174 = vmax.f32 %v170, 0.0
    %v175 = vpack.c.bf16 %v173, %v173
    %v176 = vpack.c.bf16 %v174, %v174
    %v177 = vld [vmem:[#allocation7] sm:$0xff]
    %v178 = vld [vmem:[#allocation7 + $0x8] sm:$0xff]
    %v179 = vld [vmem:[#allocation7 + $0x10] sm:$0xff]
    %v180 = vld [vmem:[#allocation7 + $0x18] sm:$0xff]
    %v181 = vld [vmem:[#allocation7 + $0x20] sm:$0xff]
    %v182 = vld [vmem:[#allocation7 + $0x28] sm:$0xff]
    %v183 = vld [vmem:[#allocation7 + $0x30] sm:$0xff]
    %v184 = vld [vmem:[#allocation7 + $0x38] sm:$0xff]
    %v185 = vld [vmem:[#allocation7 + $0x40] sm:$0xff]
    %v186 = vld [vmem:[#allocation7 + $0x48] sm:$0xff]
    %v187 = vld [vmem:[#allocation7 + $0x50] sm:$0xff]
    %v188 = vld [vmem:[#allocation7 + $0x58] sm:$0xff]
    %v189 = vld [vmem:[#allocation7 + $0x60] sm:$0xff]
    %v190 = vld [vmem:[#allocation7 + $0x68] sm:$0xff]
    %v191 = vld [vmem:[#allocation7 + $0x70] sm:$0xff]
    %v192 = vld [vmem:[#allocation7 + $0x78] sm:$0xff]
    %v193 = vld [vmem:[#allocation7 + $0x80] sm:$0xff]
    %v194 = vld [vmem:[#allocation7 + $0x88] sm:$0xff]
    %v195 = vld [vmem:[#allocation7 + $0x90] sm:$0xff]
    %v196 = vld [vmem:[#allocation7 + $0x98] sm:$0xff]
    %v197 = vld [vmem:[#allocation7 + $0xa0] sm:$0xff]
    %v198 = vld [vmem:[#allocation7 + $0xa8] sm:$0xff]
    %v199 = vld [vmem:[#allocation7 + $0xb0] sm:$0xff]
    %v200 = vld [vmem:[#allocation7 + $0xb8] sm:$0xff]
    %v201 = vld [vmem:[#allocation7 + $0xc0] sm:$0xff]
    %v202 = vld [vmem:[#allocation7 + $0xc8] sm:$0xff]
    %v203 = vld [vmem:[#allocation7 + $0xd0] sm:$0xff]
    %v204 = vld [vmem:[#allocation7 + $0xd8] sm:$0xff]
    %v205 = vld [vmem:[#allocation7 + $0xe0] sm:$0xff]
    %v206 = vld [vmem:[#allocation7 + $0xe8] sm:$0xff]
    %v207 = vld [vmem:[#allocation7 + $0xf0] sm:$0xff]
    %v208 = vld [vmem:[#allocation7 + $0xf8] sm:$0xff]
    %v209 = vld [vmem:[#allocation7 + $0x100] sm:$0xff]
    %v210 = vld [vmem:[#allocation7 + $0x108] sm:$0xff]
    %v211 = vld [vmem:[#allocation7 + $0x110] sm:$0xff]
    %v212 = vld [vmem:[#allocation7 + $0x118] sm:$0xff]
    %v213 = vld [vmem:[#allocation7 + $0x120] sm:$0xff]
    %v214 = vld [vmem:[#allocation7 + $0x128] sm:$0xff]
    %v215 = vld [vmem:[#allocation7 + $0x130] sm:$0xff]
    %v216 = vld [vmem:[#allocation7 + $0x138] sm:$0xff]
    %v217 = vld [vmem:[#allocation7 + $0x140] sm:$0xff]
    %v218 = vld [vmem:[#allocation7 + $0x148] sm:$0xff]
    %v219 = vld [vmem:[#allocation7 + $0x150] sm:$0xff]
    %v220 = vld [vmem:[#allocation7 + $0x158] sm:$0xff]
    %v221 = vld [vmem:[#allocation7 + $0x160] sm:$0xff]
    %v222 = vld [vmem:[#allocation7 + $0x168] sm:$0xff]
    %v223 = vld [vmem:[#allocation7 + $0x170] sm:$0xff]
    %v224 = vld [vmem:[#allocation7 + $0x178] sm:$0xff]
    %v225 = vld [vmem:[#allocation7 + $0x180] sm:$0xff]
    %v226 = vld [vmem:[#allocation7 + $0x188] sm:$0xff]
    %v227 = vld [vmem:[#allocation7 + $0x190] sm:$0xff]
    %v228 = vld [vmem:[#allocation7 + $0x198] sm:$0xff]
    %v229 = vld [vmem:[#allocation7 + $0x1a0] sm:$0xff]
    %v230 = vld [vmem:[#allocation7 + $0x1a8] sm:$0xff]
    %v231 = vld [vmem:[#allocation7 + $0x1b0] sm:$0xff]
    %v232 = vld [vmem:[#allocation7 + $0x1b8] sm:$0xff]
    %v233 = vld [vmem:[#allocation7 + $0x1c0] sm:$0xff]
    %v234 = vld [vmem:[#allocation7 + $0x1c8] sm:$0xff]
    %v235 = vld [vmem:[#allocation7 + $0x1d0] sm:$0xff]
    %v236 = vld [vmem:[#allocation7 + $0x1d8] sm:$0xff]
    %v237 = vld [vmem:[#allocation7 + $0x1e0] sm:$0xff]
    %v238 = vld [vmem:[#allocation7 + $0x1e8] sm:$0xff]
    %v239 = vld [vmem:[#allocation7 + $0x1f0] sm:$0xff]
    %v240 = vld [vmem:[#allocation7 + $0x1f8] sm:$0xff]
    %v241 = vld [vmem:[#allocation4 + $0x8] sm:$0xff]
    %v242 = vld [vmem:[#allocation4 + $0x28] sm:$0x77]
    %v243 = vld [vmem:[#allocation6 + $0x2] sm:$0x3]
    %v245 = vperm.slane %v243, 0
    %v246 = vperm.slane %v243, 1
    %v251 = vunpack.c.l.b16 %v241
    %v252 = vunpack.c.h.b16 %v241
    %v253 = vunpack.c.l.b16 %v242
    %v254 = vunpack.c.h.b16 %v242
    %v255 = vpack.c.b16 %v253, %v251
    %v256 = vpack.c.b16 %v254, %v252
    %v258 = vand.u32 %v255, %v140
    %v261 = vand.u32 %v256, %v140
    %263 = vmatpush.bf16.msra.mxu0 0
    %264 = vmatpush.bf16.msra.mxu0 0
    %265 = vmatpush.bf16.msra.mxu0 0
    %266 = vmatpush.bf16.msra.mxu0 0
    %267 = vmatpush.bf16.msra.mxu0 0
    %268 = vmatpush.bf16.msra.mxu0 0
    %269 = vmatpush.bf16.msra.mxu0 0
    %270 = vmatpush.bf16.msra.mxu0 %v258
    %271 = vmatmul.bf16.gmra.mxu0 %v135
    %v272 = vpop.f32.mrf.mxu0
    %v273 = vadd.f32 %v245, %v272
    %v274 = vpop.f32.mrf.mxu0
    %275 = vdwg.mxu0
    %276 = vmatpush.bf16.msra.mxu0 0
    %277 = vmatpush.bf16.msra.mxu0 0
    %278 = vmatpush.bf16.msra.mxu0 0
    %279 = vmatpush.bf16.msra.mxu0 0
    %280 = vmatpush.bf16.msra.mxu0 0
    %281 = vmatpush.bf16.msra.mxu0 0
    %282 = vmatpush.bf16.msra.mxu0 0
    %283 = vmatpush.bf16.msra.mxu0 %v261
    %284 = vmatmul.bf16.gmra.mxu0 %v135
    %v285 = vpop.f32.mrf.mxu0
    %v286 = vadd.f32 %v246, %v285
    %v287 = vpop.f32.mrf.mxu0
    %288 = vdwg.mxu0
    %v289 = vmax.f32 %v273, 0.0
    %v290 = vmax.f32 %v286, 0.0
    %v291 = vpack.c.bf16 %v289, %v289
    %v292 = vpack.c.bf16 %v290, %v290
    %v293 = vld [vmem:[#allocation7 + $0x200] sm:$0xff]
    %v294 = vld [vmem:[#allocation7 + $0x208] sm:$0xff]
    %v295 = vld [vmem:[#allocation7 + $0x210] sm:$0xff]
    %v296 = vld [vmem:[#allocation7 + $0x218] sm:$0xff]
    %v297 = vld [vmem:[#allocation7 + $0x220] sm:$0xff]
    %v298 = vld [vmem:[#allocation7 + $0x228] sm:$0xff]
    %v299 = vld [vmem:[#allocation7 + $0x230] sm:$0xff]
    %v300 = vld [vmem:[#allocation7 + $0x238] sm:$0xff]
    %v301 = vld [vmem:[#allocation7 + $0x240] sm:$0xff]
    %v302 = vld [vmem:[#allocation7 + $0x248] sm:$0xff]
    %v303 = vld [vmem:[#allocation7 + $0x250] sm:$0xff]
    %v304 = vld [vmem:[#allocation7 + $0x258] sm:$0xff]
    %v305 = vld [vmem:[#allocation7 + $0x260] sm:$0xff]
    %v306 = vld [vmem:[#allocation7 + $0x268] sm:$0xff]
    %v307 = vld [vmem:[#allocation7 + $0x270] sm:$0xff]
    %v308 = vld [vmem:[#allocation7 + $0x278] sm:$0xff]
    %v309 = vld [vmem:[#allocation7 + $0x280] sm:$0xff]
    %v310 = vld [vmem:[#allocation7 + $0x288] sm:$0xff]
    %v311 = vld [vmem:[#allocation7 + $0x290] sm:$0xff]
    %v312 = vld [vmem:[#allocation7 + $0x298] sm:$0xff]
    %v313 = vld [vmem:[#allocation7 + $0x2a0] sm:$0xff]
    %v314 = vld [vmem:[#allocation7 + $0x2a8] sm:$0xff]
    %v315 = vld [vmem:[#allocation7 + $0x2b0] sm:$0xff]
    %v316 = vld [vmem:[#allocation7 + $0x2b8] sm:$0xff]
    %v317 = vld [vmem:[#allocation7 + $0x2c0] sm:$0xff]
    %v318 = vld [vmem:[#allocation7 + $0x2c8] sm:$0xff]
    %v319 = vld [vmem:[#allocation7 + $0x2d0] sm:$0xff]
    %v320 = vld [vmem:[#allocation7 + $0x2d8] sm:$0xff]
    %v321 = vld [vmem:[#allocation7 + $0x2e0] sm:$0xff]
    %v322 = vld [vmem:[#allocation7 + $0x2e8] sm:$0xff]
    %v323 = vld [vmem:[#allocation7 + $0x2f0] sm:$0xff]
    %v324 = vld [vmem:[#allocation7 + $0x2f8] sm:$0xff]
    %v325 = vld [vmem:[#allocation7 + $0x300] sm:$0xff]
    %v326 = vld [vmem:[#allocation7 + $0x308] sm:$0xff]
    %v327 = vld [vmem:[#allocation7 + $0x310] sm:$0xff]
    %v328 = vld [vmem:[#allocation7 + $0x318] sm:$0xff]
    %v329 = vld [vmem:[#allocation7 + $0x320] sm:$0xff]
    %v330 = vld [vmem:[#allocation7 + $0x328] sm:$0xff]
    %v331 = vld [vmem:[#allocation7 + $0x330] sm:$0xff]
    %v332 = vld [vmem:[#allocation7 + $0x338] sm:$0xff]
    %v333 = vld [vmem:[#allocation7 + $0x340] sm:$0xff]
    %v334 = vld [vmem:[#allocation7 + $0x348] sm:$0xff]
    %v335 = vld [vmem:[#allocation7 + $0x350] sm:$0xff]
    %v336 = vld [vmem:[#allocation7 + $0x358] sm:$0xff]
    %v337 = vld [vmem:[#allocation7 + $0x360] sm:$0xff]
    %v338 = vld [vmem:[#allocation7 + $0x368] sm:$0xff]
    %v339 = vld [vmem:[#allocation7 + $0x370] sm:$0xff]
    %v340 = vld [vmem:[#allocation7 + $0x378] sm:$0xff]
    %v341 = vld [vmem:[#allocation7 + $0x380] sm:$0xff]
    %v342 = vld [vmem:[#allocation7 + $0x388] sm:$0xff]
    %v343 = vld [vmem:[#allocation7 + $0x390] sm:$0xff]
    %v344 = vld [vmem:[#allocation7 + $0x398] sm:$0xff]
    %v345 = vld [vmem:[#allocation7 + $0x3a0] sm:$0xff]
    %v346 = vld [vmem:[#allocation7 + $0x3a8] sm:$0xff]
    %v347 = vld [vmem:[#allocation7 + $0x3b0] sm:$0xff]
    %v348 = vld [vmem:[#allocation7 + $0x3b8] sm:$0xff]
    %v349 = vld [vmem:[#allocation7 + $0x3c0] sm:$0xff]
    %v350 = vld [vmem:[#allocation7 + $0x3c8] sm:$0xff]
    %v351 = vld [vmem:[#allocation7 + $0x3d0] sm:$0xff]
    %v352 = vld [vmem:[#allocation7 + $0x3d8] sm:$0xff]
    %v353 = vld [vmem:[#allocation7 + $0x3e0] sm:$0xff]
    %v354 = vld [vmem:[#allocation7 + $0x3e8] sm:$0xff]
    %v355 = vld [vmem:[#allocation7 + $0x3f0] sm:$0xff]
    %v356 = vld [vmem:[#allocation7 + $0x3f8] sm:$0xff]
    %v421 = vunpack.c.l.b16 %v293
    %v422 = vunpack.c.h.b16 %v293
    %v423 = vunpack.c.l.b16 %v294
    %v424 = vunpack.c.h.b16 %v294
    %v425 = vunpack.c.l.b16 %v295
    %v426 = vunpack.c.h.b16 %v295
    %v427 = vunpack.c.l.b16 %v296
    %v428 = vunpack.c.h.b16 %v296
    %v429 = vunpack.c.l.b16 %v297
    %v430 = vunpack.c.h.b16 %v297
    %v431 = vunpack.c.l.b16 %v298
    %v432 = vunpack.c.h.b16 %v298
    %v433 = vunpack.c.l.b16 %v299
    %v434 = vunpack.c.h.b16 %v299
    %v435 = vunpack.c.l.b16 %v300
    %v436 = vunpack.c.h.b16 %v300
    %v437 = vunpack.c.l.b16 %v301
    %v438 = vunpack.c.h.b16 %v301
    %v439 = vunpack.c.l.b16 %v302
    %v440 = vunpack.c.h.b16 %v302
    %v441 = vunpack.c.l.b16 %v303
    %v442 = vunpack.c.h.b16 %v303
    %v443 = vunpack.c.l.b16 %v304
    %v444 = vunpack.c.h.b16 %v304
    %v445 = vunpack.c.l.b16 %v305
    %v446 = vunpack.c.h.b16 %v305
    %v447 = vunpack.c.l.b16 %v306
    %v448 = vunpack.c.h.b16 %v306
    %v449 = vunpack.c.l.b16 %v307
    %v450 = vunpack.c.h.b16 %v307
    %v451 = vunpack.c.l.b16 %v308
    %v452 = vunpack.c.h.b16 %v308
    %v453 = vunpack.c.l.b16 %v309
    %v454 = vunpack.c.h.b16 %v309
    %v455 = vunpack.c.l.b16 %v310
    %v456 = vunpack.c.h.b16 %v310
    %v457 = vunpack.c.l.b16 %v311
    %v458 = vunpack.c.h.b16 %v311
    %v459 = vunpack.c.l.b16 %v312
    %v460 = vunpack.c.h.b16 %v312
    %v461 = vunpack.c.l.b16 %v313
    %v462 = vunpack.c.h.b16 %v313
    %v463 = vunpack.c.l.b16 %v314
    %v464 = vunpack.c.h.b16 %v314
    %v465 = vunpack.c.l.b16 %v315
    %v466 = vunpack.c.h.b16 %v315
    %v467 = vunpack.c.l.b16 %v316
    %v468 = vunpack.c.h.b16 %v316
    %v469 = vunpack.c.l.b16 %v317
    %v470 = vunpack.c.h.b16 %v317
    %v471 = vunpack.c.l.b16 %v318
    %v472 = vunpack.c.h.b16 %v318
    %v473 = vunpack.c.l.b16 %v319
    %v474 = vunpack.c.h.b16 %v319
    %v475 = vunpack.c.l.b16 %v320
    %v476 = vunpack.c.h.b16 %v320
    %v477 = vunpack.c.l.b16 %v321
    %v478 = vunpack.c.h.b16 %v321
    %v479 = vunpack.c.l.b16 %v322
    %v480 = vunpack.c.h.b16 %v322
    %v481 = vunpack.c.l.b16 %v323
    %v482 = vunpack.c.h.b16 %v323
    %v483 = vunpack.c.l.b16 %v324
    %v484 = vunpack.c.h.b16 %v324
    %v485 = vunpack.c.l.b16 %v325
    %v486 = vunpack.c.h.b16 %v325
    %v487 = vunpack.c.l.b16 %v326
    %v488 = vunpack.c.h.b16 %v326
    %v489 = vunpack.c.l.b16 %v327
    %v490 = vunpack.c.h.b16 %v327
    %v491 = vunpack.c.l.b16 %v328
    %v492 = vunpack.c.h.b16 %v328
    %v493 = vunpack.c.l.b16 %v329
    %v494 = vunpack.c.h.b16 %v329
    %v495 = vunpack.c.l.b16 %v330
    %v496 = vunpack.c.h.b16 %v330
    %v497 = vunpack.c.l.b16 %v331
    %v498 = vunpack.c.h.b16 %v331
    %v499 = vunpack.c.l.b16 %v332
    %v500 = vunpack.c.h.b16 %v332
    %v501 = vunpack.c.l.b16 %v333
    %v502 = vunpack.c.h.b16 %v333
    %v503 = vunpack.c.l.b16 %v334
    %v504 = vunpack.c.h.b16 %v334
    %v505 = vunpack.c.l.b16 %v335
    %v506 = vunpack.c.h.b16 %v335
    %v507 = vunpack.c.l.b16 %v336
    %v508 = vunpack.c.h.b16 %v336
    %v509 = vunpack.c.l.b16 %v337
    %v510 = vunpack.c.h.b16 %v337
    %v511 = vunpack.c.l.b16 %v338
    %v512 = vunpack.c.h.b16 %v338
    %v513 = vunpack.c.l.b16 %v339
    %v514 = vunpack.c.h.b16 %v339
    %v515 = vunpack.c.l.b16 %v340
    %v516 = vunpack.c.h.b16 %v340
    %v517 = vunpack.c.l.b16 %v341
    %v518 = vunpack.c.h.b16 %v341
    %v519 = vunpack.c.l.b16 %v342
    %v520 = vunpack.c.h.b16 %v342
    %v521 = vunpack.c.l.b16 %v343
    %v522 = vunpack.c.h.b16 %v343
    %v523 = vunpack.c.l.b16 %v344
    %v524 = vunpack.c.h.b16 %v344
    %v525 = vunpack.c.l.b16 %v345
    %v526 = vunpack.c.h.b16 %v345
    %v527 = vunpack.c.l.b16 %v346
    %v528 = vunpack.c.h.b16 %v346
    %v529 = vunpack.c.l.b16 %v347
    %v530 = vunpack.c.h.b16 %v347
    %v531 = vunpack.c.l.b16 %v348
    %v532 = vunpack.c.h.b16 %v348
    %v533 = vunpack.c.l.b16 %v349
    %v534 = vunpack.c.h.b16 %v349
    %v535 = vunpack.c.l.b16 %v350
    %v536 = vunpack.c.h.b16 %v350
    %v537 = vunpack.c.l.b16 %v351
    %v538 = vunpack.c.h.b16 %v351
    %v539 = vunpack.c.l.b16 %v352
    %v540 = vunpack.c.h.b16 %v352
    %v541 = vunpack.c.l.b16 %v353
    %v542 = vunpack.c.h.b16 %v353
    %v543 = vunpack.c.l.b16 %v354
    %v544 = vunpack.c.h.b16 %v354
    %v545 = vunpack.c.l.b16 %v355
    %v546 = vunpack.c.h.b16 %v355
    %v547 = vunpack.c.l.b16 %v356
    %v548 = vunpack.c.h.b16 %v356
    %v549 = vpack.c.b16 %v425, %v421
    %v550 = vpack.c.b16 %v426, %v422
    %v551 = vpack.c.b16 %v427, %v423
    %v552 = vpack.c.b16 %v428, %v424
    %v553 = vpack.c.b16 %v433, %v429
    %v554 = vpack.c.b16 %v434, %v430
    %v555 = vpack.c.b16 %v435, %v431
    %v556 = vpack.c.b16 %v436, %v432
    %v557 = vpack.c.b16 %v441, %v437
    %v558 = vpack.c.b16 %v442, %v438
    %v559 = vpack.c.b16 %v443, %v439
    %v560 = vpack.c.b16 %v444, %v440
    %v561 = vpack.c.b16 %v449, %v445
    %v562 = vpack.c.b16 %v450, %v446
    %v563 = vpack.c.b16 %v451, %v447
    %v564 = vpack.c.b16 %v452, %v448
    %v565 = vpack.c.b16 %v457, %v453
    %v566 = vpack.c.b16 %v458, %v454
    %v567 = vpack.c.b16 %v459, %v455
    %v568 = vpack.c.b16 %v460, %v456
    %v569 = vpack.c.b16 %v465, %v461
    %v570 = vpack.c.b16 %v466, %v462
    %v571 = vpack.c.b16 %v467, %v463
    %v572 = vpack.c.b16 %v468, %v464
    %v573 = vpack.c.b16 %v473, %v469
    %v574 = vpack.c.b16 %v474, %v470
    %v575 = vpack.c.b16 %v475, %v471
    %v576 = vpack.c.b16 %v476, %v472
    %v577 = vpack.c.b16 %v481, %v477
    %v578 = vpack.c.b16 %v482, %v478
    %v579 = vpack.c.b16 %v483, %v479
    %v580 = vpack.c.b16 %v484, %v480
    %v581 = vpack.c.b16 %v489, %v485
    %v582 = vpack.c.b16 %v490, %v486
    %v583 = vpack.c.b16 %v491, %v487
    %v584 = vpack.c.b16 %v492, %v488
    %v585 = vpack.c.b16 %v497, %v493
    %v586 = vpack.c.b16 %v498, %v494
    %v587 = vpack.c.b16 %v499, %v495
    %v588 = vpack.c.b16 %v500, %v496
    %v589 = vpack.c.b16 %v505, %v501
    %v590 = vpack.c.b16 %v506, %v502
    %v591 = vpack.c.b16 %v507, %v503
    %v592 = vpack.c.b16 %v508, %v504
    %v593 = vpack.c.b16 %v513, %v509
    %v594 = vpack.c.b16 %v514, %v510
    %v595 = vpack.c.b16 %v515, %v511
    %v596 = vpack.c.b16 %v516, %v512
    %v597 = vpack.c.b16 %v521, %v517
    %v598 = vpack.c.b16 %v522, %v518
    %v599 = vpack.c.b16 %v523, %v519
    %v600 = vpack.c.b16 %v524, %v520
    %v601 = vpack.c.b16 %v529, %v525
    %v602 = vpack.c.b16 %v530, %v526
    %v603 = vpack.c.b16 %v531, %v527
    %v604 = vpack.c.b16 %v532, %v528
    %v605 = vpack.c.b16 %v537, %v533
    %v606 = vpack.c.b16 %v538, %v534
    %v607 = vpack.c.b16 %v539, %v535
    %v608 = vpack.c.b16 %v540, %v536
    %v609 = vpack.c.b16 %v545, %v541
    %v610 = vpack.c.b16 %v546, %v542
    %v611 = vpack.c.b16 %v547, %v543
    %v612 = vpack.c.b16 %v548, %v544
    %677 = vmatpush.bf16.msra.mxu0 %v577
    %678 = vmatpush.bf16.msra.mxu0 %v573
    %679 = vmatpush.bf16.msra.mxu0 %v569
    %680 = vmatpush.bf16.msra.mxu0 %v565
    %681 = vmatpush.bf16.msra.mxu0 %v561
    %682 = vmatpush.bf16.msra.mxu0 %v557
    %683 = vmatpush.bf16.msra.mxu0 %v553
    %684 = vmatpush.bf16.msra.mxu0 %v549
    %685 = vmatmul.bf16.gmra.mxu0 %v291
    %v686 = vpop.f32.mrf.mxu0
    %v687 = vadd.f32 0.0, %v686
    %v688 = vpop.f32.mrf.mxu0
    %689 = vdwg.mxu0
    %690 = vmatpush.bf16.msra.mxu0 %v609
    %691 = vmatpush.bf16.msra.mxu0 %v605
    %692 = vmatpush.bf16.msra.mxu0 %v601
    %693 = vmatpush.bf16.msra.mxu0 %v597
    %694 = vmatpush.bf16.msra.mxu0 %v593
    %695 = vmatpush.bf16.msra.mxu0 %v589
    %696 = vmatpush.bf16.msra.mxu0 %v585
    %697 = vmatpush.bf16.msra.mxu0 %v581
    %698 = vmatmul.bf16.gmra.mxu0 %v292
    %v699 = vpop.f32.mrf.mxu0
    %v700 = vadd.f32 %v687, %v699
    %v701 = vpop.f32.mrf.mxu0
    %702 = vdwg.mxu0
    %703 = vmatpush.bf16.msra.mxu0 %v578
    %704 = vmatpush.bf16.msra.mxu0 %v574
    %705 = vmatpush.bf16.msra.mxu0 %v570
    %706 = vmatpush.bf16.msra.mxu0 %v566
    %707 = vmatpush.bf16.msra.mxu0 %v562
    %708 = vmatpush.bf16.msra.mxu0 %v558
    %709 = vmatpush.bf16.msra.mxu0 %v554
    %710 = vmatpush.bf16.msra.mxu0 %v550
    %711 = vmatmul.bf16.gmra.mxu0 %v291
    %v712 = vpop.f32.mrf.mxu0
    %v713 = vadd.f32 0.0, %v712
    %v714 = vpop.f32.mrf.mxu0
    %715 = vdwg.mxu0
    %716 = vmatpush.bf16.msra.mxu0 %v610
    %717 = vmatpush.bf16.msra.mxu0 %v606
    %718 = vmatpush.bf16.msra.mxu0 %v602
    %719 = vmatpush.bf16.msra.mxu0 %v598
    %720 = vmatpush.bf16.msra.mxu0 %v594
    %721 = vmatpush.bf16.msra.mxu0 %v590
    %722 = vmatpush.bf16.msra.mxu0 %v586
    %723 = vmatpush.bf16.msra.mxu0 %v582
    %724 = vmatmul.bf16.gmra.mxu0 %v292
    %v725 = vpop.f32.mrf.mxu0
    %v726 = vadd.f32 %v713, %v725
    %v727 = vpop.f32.mrf.mxu0
    %728 = vdwg.mxu0
    %729 = vmatpush.bf16.msra.mxu0 %v579
    %730 = vmatpush.bf16.msra.mxu0 %v575
    %731 = vmatpush.bf16.msra.mxu0 %v571
    %732 = vmatpush.bf16.msra.mxu0 %v567
    %733 = vmatpush.bf16.msra.mxu0 %v563
    %734 = vmatpush.bf16.msra.mxu0 %v559
    %735 = vmatpush.bf16.msra.mxu0 %v555
    %736 = vmatpush.bf16.msra.mxu0 %v551
    %737 = vmatmul.bf16.gmra.mxu0 %v291
    %v738 = vpop.f32.mrf.mxu0
    %v739 = vadd.f32 0.0, %v738
    %v740 = vpop.f32.mrf.mxu0
    %741 = vdwg.mxu0
    %742 = vmatpush.bf16.msra.mxu0 %v611
    %743 = vmatpush.bf16.msra.mxu0 %v607
    %744 = vmatpush.bf16.msra.mxu0 %v603
    %745 = vmatpush.bf16.msra.mxu0 %v599
    %746 = vmatpush.bf16.msra.mxu0 %v595
    %747 = vmatpush.bf16.msra.mxu0 %v591
    %748 = vmatpush.bf16.msra.mxu0 %v587
    %749 = vmatpush.bf16.msra.mxu0 %v583
    %750 = vmatmul.bf16.gmra.mxu0 %v292
    %v751 = vpop.f32.mrf.mxu0
    %v752 = vadd.f32 %v739, %v751
    %v753 = vpop.f32.mrf.mxu0
    %754 = vdwg.mxu0
    %755 = vmatpush.bf16.msra.mxu0 %v580
    %756 = vmatpush.bf16.msra.mxu0 %v576
    %757 = vmatpush.bf16.msra.mxu0 %v572
    %758 = vmatpush.bf16.msra.mxu0 %v568
    %759 = vmatpush.bf16.msra.mxu0 %v564
    %760 = vmatpush.bf16.msra.mxu0 %v560
    %761 = vmatpush.bf16.msra.mxu0 %v556
    %762 = vmatpush.bf16.msra.mxu0 %v552
    %763 = vmatmul.bf16.gmra.mxu0 %v291
    %v764 = vpop.f32.mrf.mxu0
    %v765 = vadd.f32 0.0, %v764
    %v766 = vpop.f32.mrf.mxu0
    %767 = vdwg.mxu0
    %768 = vmatpush.bf16.msra.mxu0 %v612
    %769 = vmatpush.bf16.msra.mxu0 %v608
    %770 = vmatpush.bf16.msra.mxu0 %v604
    %771 = vmatpush.bf16.msra.mxu0 %v600
    %772 = vmatpush.bf16.msra.mxu0 %v596
    %773 = vmatpush.bf16.msra.mxu0 %v592
    %774 = vmatpush.bf16.msra.mxu0 %v588
    %775 = vmatpush.bf16.msra.mxu0 %v584
    %776 = vmatmul.bf16.gmra.mxu0 %v292
    %v777 = vpop.f32.mrf.mxu0
    %v778 = vadd.f32 %v765, %v777
    %v779 = vpop.f32.mrf.mxu0
    %780 = vdwg.mxu0
    %v845 = vunpack.c.l.b16 %v177
    %v846 = vunpack.c.h.b16 %v177
    %v847 = vunpack.c.l.b16 %v178
    %v848 = vunpack.c.h.b16 %v178
    %v849 = vunpack.c.l.b16 %v179
    %v850 = vunpack.c.h.b16 %v179
    %v851 = vunpack.c.l.b16 %v180
    %v852 = vunpack.c.h.b16 %v180
    %v853 = vunpack.c.l.b16 %v181
    %v854 = vunpack.c.h.b16 %v181
    %v855 = vunpack.c.l.b16 %v182
    %v856 = vunpack.c.h.b16 %v182
    %v857 = vunpack.c.l.b16 %v183
    %v858 = vunpack.c.h.b16 %v183
    %v859 = vunpack.c.l.b16 %v184
    %v860 = vunpack.c.h.b16 %v184
    %v861 = vunpack.c.l.b16 %v185
    %v862 = vunpack.c.h.b16 %v185
    %v863 = vunpack.c.l.b16 %v186
    %v864 = vunpack.c.h.b16 %v186
    %v865 = vunpack.c.l.b16 %v187
    %v866 = vunpack.c.h.b16 %v187
    %v867 = vunpack.c.l.b16 %v188
    %v868 = vunpack.c.h.b16 %v188
    %v869 = vunpack.c.l.b16 %v189
    %v870 = vunpack.c.h.b16 %v189
    %v871 = vunpack.c.l.b16 %v190
    %v872 = vunpack.c.h.b16 %v190
    %v873 = vunpack.c.l.b16 %v191
    %v874 = vunpack.c.h.b16 %v191
    %v875 = vunpack.c.l.b16 %v192
    %v876 = vunpack.c.h.b16 %v192
    %v877 = vunpack.c.l.b16 %v193
    %v878 = vunpack.c.h.b16 %v193
    %v879 = vunpack.c.l.b16 %v194
    %v880 = vunpack.c.h.b16 %v194
    %v881 = vunpack.c.l.b16 %v195
    %v882 = vunpack.c.h.b16 %v195
    %v883 = vunpack.c.l.b16 %v196
    %v884 = vunpack.c.h.b16 %v196
    %v885 = vunpack.c.l.b16 %v197
    %v886 = vunpack.c.h.b16 %v197
    %v887 = vunpack.c.l.b16 %v198
    %v888 = vunpack.c.h.b16 %v198
    %v889 = vunpack.c.l.b16 %v199
    %v890 = vunpack.c.h.b16 %v199
    %v891 = vunpack.c.l.b16 %v200
    %v892 = vunpack.c.h.b16 %v200
    %v893 = vunpack.c.l.b16 %v201
    %v894 = vunpack.c.h.b16 %v201
    %v895 = vunpack.c.l.b16 %v202
    %v896 = vunpack.c.h.b16 %v202
    %v897 = vunpack.c.l.b16 %v203
    %v898 = vunpack.c.h.b16 %v203
    %v899 = vunpack.c.l.b16 %v204
    %v900 = vunpack.c.h.b16 %v204
    %v901 = vunpack.c.l.b16 %v205
    %v902 = vunpack.c.h.b16 %v205
    %v903 = vunpack.c.l.b16 %v206
    %v904 = vunpack.c.h.b16 %v206
    %v905 = vunpack.c.l.b16 %v207
    %v906 = vunpack.c.h.b16 %v207
    %v907 = vunpack.c.l.b16 %v208
    %v908 = vunpack.c.h.b16 %v208
    %v909 = vunpack.c.l.b16 %v209
    %v910 = vunpack.c.h.b16 %v209
    %v911 = vunpack.c.l.b16 %v210
    %v912 = vunpack.c.h.b16 %v210
    %v913 = vunpack.c.l.b16 %v211
    %v914 = vunpack.c.h.b16 %v211
    %v915 = vunpack.c.l.b16 %v212
    %v916 = vunpack.c.h.b16 %v212
    %v917 = vunpack.c.l.b16 %v213
    %v918 = vunpack.c.h.b16 %v213
    %v919 = vunpack.c.l.b16 %v214
    %v920 = vunpack.c.h.b16 %v214
    %v921 = vunpack.c.l.b16 %v215
    %v922 = vunpack.c.h.b16 %v215
    %v923 = vunpack.c.l.b16 %v216
    %v924 = vunpack.c.h.b16 %v216
    %v925 = vunpack.c.l.b16 %v217
    %v926 = vunpack.c.h.b16 %v217
    %v927 = vunpack.c.l.b16 %v218
    %v928 = vunpack.c.h.b16 %v218
    %v929 = vunpack.c.l.b16 %v219
    %v930 = vunpack.c.h.b16 %v219
    %v931 = vunpack.c.l.b16 %v220
    %v932 = vunpack.c.h.b16 %v220
    %v933 = vunpack.c.l.b16 %v221
    %v934 = vunpack.c.h.b16 %v221
    %v935 = vunpack.c.l.b16 %v222
    %v936 = vunpack.c.h.b16 %v222
    %v937 = vunpack.c.l.b16 %v223
    %v938 = vunpack.c.h.b16 %v223
    %v939 = vunpack.c.l.b16 %v224
    %v940 = vunpack.c.h.b16 %v224
    %v941 = vunpack.c.l.b16 %v225
    %v942 = vunpack.c.h.b16 %v225
    %v943 = vunpack.c.l.b16 %v226
    %v944 = vunpack.c.h.b16 %v226
    %v945 = vunpack.c.l.b16 %v227
    %v946 = vunpack.c.h.b16 %v227
    %v947 = vunpack.c.l.b16 %v228
    %v948 = vunpack.c.h.b16 %v228
    %v949 = vunpack.c.l.b16 %v229
    %v950 = vunpack.c.h.b16 %v229
    %v951 = vunpack.c.l.b16 %v230
    %v952 = vunpack.c.h.b16 %v230
    %v953 = vunpack.c.l.b16 %v231
    %v954 = vunpack.c.h.b16 %v231
    %v955 = vunpack.c.l.b16 %v232
    %v956 = vunpack.c.h.b16 %v232
    %v957 = vunpack.c.l.b16 %v233
    %v958 = vunpack.c.h.b16 %v233
    %v959 = vunpack.c.l.b16 %v234
    %v960 = vunpack.c.h.b16 %v234
    %v961 = vunpack.c.l.b16 %v235
    %v962 = vunpack.c.h.b16 %v235
    %v963 = vunpack.c.l.b16 %v236
    %v964 = vunpack.c.h.b16 %v236
    %v965 = vunpack.c.l.b16 %v237
    %v966 = vunpack.c.h.b16 %v237
    %v967 = vunpack.c.l.b16 %v238
    %v968 = vunpack.c.h.b16 %v238
    %v969 = vunpack.c.l.b16 %v239
    %v970 = vunpack.c.h.b16 %v239
    %v971 = vunpack.c.l.b16 %v240
    %v972 = vunpack.c.h.b16 %v240
    %v973 = vpack.c.b16 %v849, %v845
    %v974 = vpack.c.b16 %v850, %v846
    %v975 = vpack.c.b16 %v851, %v847
    %v976 = vpack.c.b16 %v852, %v848
    %v977 = vpack.c.b16 %v857, %v853
    %v978 = vpack.c.b16 %v858, %v854
    %v979 = vpack.c.b16 %v859, %v855
    %v980 = vpack.c.b16 %v860, %v856
    %v981 = vpack.c.b16 %v865, %v861
    %v982 = vpack.c.b16 %v866, %v862
    %v983 = vpack.c.b16 %v867, %v863
    %v984 = vpack.c.b16 %v868, %v864
    %v985 = vpack.c.b16 %v873, %v869
    %v986 = vpack.c.b16 %v874, %v870
    %v987 = vpack.c.b16 %v875, %v871
    %v988 = vpack.c.b16 %v876, %v872
    %v989 = vpack.c.b16 %v881, %v877
    %v990 = vpack.c.b16 %v882, %v878
    %v991 = vpack.c.b16 %v883, %v879
    %v992 = vpack.c.b16 %v884, %v880
    %v993 = vpack.c.b16 %v889, %v885
    %v994 = vpack.c.b16 %v890, %v886
    %v995 = vpack.c.b16 %v891, %v887
    %v996 = vpack.c.b16 %v892, %v888
    %v997 = vpack.c.b16 %v897, %v893
    %v998 = vpack.c.b16 %v898, %v894
    %v999 = vpack.c.b16 %v899, %v895
    %v1000 = vpack.c.b16 %v900, %v896
    %v1001 = vpack.c.b16 %v905, %v901
    %v1002 = vpack.c.b16 %v906, %v902
    %v1003 = vpack.c.b16 %v907, %v903
    %v1004 = vpack.c.b16 %v908, %v904
    %v1005 = vpack.c.b16 %v913, %v909
    %v1006 = vpack.c.b16 %v914, %v910
    %v1007 = vpack.c.b16 %v915, %v911
    %v1008 = vpack.c.b16 %v916, %v912
    %v1009 = vpack.c.b16 %v921, %v917
    %v1010 = vpack.c.b16 %v922, %v918
    %v1011 = vpack.c.b16 %v923, %v919
    %v1012 = vpack.c.b16 %v924, %v920
    %v1013 = vpack.c.b16 %v929, %v925
    %v1014 = vpack.c.b16 %v930, %v926
    %v1015 = vpack.c.b16 %v931, %v927
    %v1016 = vpack.c.b16 %v932, %v928
    %v1017 = vpack.c.b16 %v937, %v933
    %v1018 = vpack.c.b16 %v938, %v934
    %v1019 = vpack.c.b16 %v939, %v935
    %v1020 = vpack.c.b16 %v940, %v936
    %v1021 = vpack.c.b16 %v945, %v941
    %v1022 = vpack.c.b16 %v946, %v942
    %v1023 = vpack.c.b16 %v947, %v943
    %v1024 = vpack.c.b16 %v948, %v944
    %v1025 = vpack.c.b16 %v953, %v949
    %v1026 = vpack.c.b16 %v954, %v950
    %v1027 = vpack.c.b16 %v955, %v951
    %v1028 = vpack.c.b16 %v956, %v952
    %v1029 = vpack.c.b16 %v961, %v957
    %v1030 = vpack.c.b16 %v962, %v958
    %v1031 = vpack.c.b16 %v963, %v959
    %v1032 = vpack.c.b16 %v964, %v960
    %v1033 = vpack.c.b16 %v969, %v965
    %v1034 = vpack.c.b16 %v970, %v966
    %v1035 = vpack.c.b16 %v971, %v967
    %v1036 = vpack.c.b16 %v972, %v968
    %1101 = vmatpush.bf16.msra.mxu0 %v1001
    %1102 = vmatpush.bf16.msra.mxu0 %v997
    %1103 = vmatpush.bf16.msra.mxu0 %v993
    %1104 = vmatpush.bf16.msra.mxu0 %v989
    %1105 = vmatpush.bf16.msra.mxu0 %v985
    %1106 = vmatpush.bf16.msra.mxu0 %v981
    %1107 = vmatpush.bf16.msra.mxu0 %v977
    %1108 = vmatpush.bf16.msra.mxu0 %v973
    %1109 = vmatmul.bf16.gmra.mxu0 %v175
    %v1110 = vpop.f32.mrf.mxu0
    %v1111 = vadd.f32 %v700, %v1110
    %v1112 = vpop.f32.mrf.mxu0
    %1113 = vdwg.mxu0
    %1114 = vmatpush.bf16.msra.mxu0 %v1033
    %1115 = vmatpush.bf16.msra.mxu0 %v1029
    %1116 = vmatpush.bf16.msra.mxu0 %v1025
    %1117 = vmatpush.bf16.msra.mxu0 %v1021
    %1118 = vmatpush.bf16.msra.mxu0 %v1017
    %1119 = vmatpush.bf16.msra.mxu0 %v1013
    %1120 = vmatpush.bf16.msra.mxu0 %v1009
    %1121 = vmatpush.bf16.msra.mxu0 %v1005
    %1122 = vmatmul.bf16.gmra.mxu0 %v176
    %v1123 = vpop.f32.mrf.mxu0
    %v1124 = vadd.f32 %v1111, %v1123
    %v1125 = vpop.f32.mrf.mxu0
    %1126 = vdwg.mxu0
    %1127 = vmatpush.bf16.msra.mxu0 %v1002
    %1128 = vmatpush.bf16.msra.mxu0 %v998
    %1129 = vmatpush.bf16.msra.mxu0 %v994
    %1130 = vmatpush.bf16.msra.mxu0 %v990
    %1131 = vmatpush.bf16.msra.mxu0 %v986
    %1132 = vmatpush.bf16.msra.mxu0 %v982
    %1133 = vmatpush.bf16.msra.mxu0 %v978
    %1134 = vmatpush.bf16.msra.mxu0 %v974
    %1135 = vmatmul.bf16.gmra.mxu0 %v175
    %v1136 = vpop.f32.mrf.mxu0
    %v1137 = vadd.f32 %v726, %v1136
    %v1138 = vpop.f32.mrf.mxu0
    %1139 = vdwg.mxu0
    %1140 = vmatpush.bf16.msra.mxu0 %v1034
    %1141 = vmatpush.bf16.msra.mxu0 %v1030
    %1142 = vmatpush.bf16.msra.mxu0 %v1026
    %1143 = vmatpush.bf16.msra.mxu0 %v1022
    %1144 = vmatpush.bf16.msra.mxu0 %v1018
    %1145 = vmatpush.bf16.msra.mxu0 %v1014
    %1146 = vmatpush.bf16.msra.mxu0 %v1010
    %1147 = vmatpush.bf16.msra.mxu0 %v1006
    %1148 = vmatmul.bf16.gmra.mxu0 %v176
    %v1149 = vpop.f32.mrf.mxu0
    %v1150 = vadd.f32 %v1137, %v1149
    %v1151 = vpop.f32.mrf.mxu0
    %1152 = vdwg.mxu0
    %1153 = vmatpush.bf16.msra.mxu0 %v1003
    %1154 = vmatpush.bf16.msra.mxu0 %v999
    %1155 = vmatpush.bf16.msra.mxu0 %v995
    %1156 = vmatpush.bf16.msra.mxu0 %v991
    %1157 = vmatpush.bf16.msra.mxu0 %v987
    %1158 = vmatpush.bf16.msra.mxu0 %v983
    %1159 = vmatpush.bf16.msra.mxu0 %v979
    %1160 = vmatpush.bf16.msra.mxu0 %v975
    %1161 = vmatmul.bf16.gmra.mxu0 %v175
    %v1162 = vpop.f32.mrf.mxu0
    %v1163 = vadd.f32 %v752, %v1162
    %v1164 = vpop.f32.mrf.mxu0
    %1165 = vdwg.mxu0
    %1166 = vmatpush.bf16.msra.mxu0 %v1035
    %1167 = vmatpush.bf16.msra.mxu0 %v1031
    %1168 = vmatpush.bf16.msra.mxu0 %v1027
    %1169 = vmatpush.bf16.msra.mxu0 %v1023
    %1170 = vmatpush.bf16.msra.mxu0 %v1019
    %1171 = vmatpush.bf16.msra.mxu0 %v1015
    %1172 = vmatpush.bf16.msra.mxu0 %v1011
    %1173 = vmatpush.bf16.msra.mxu0 %v1007
    %1174 = vmatmul.bf16.gmra.mxu0 %v176
    %v1175 = vpop.f32.mrf.mxu0
    %v1176 = vadd.f32 %v1163, %v1175
    %v1177 = vpop.f32.mrf.mxu0
    %1178 = vdwg.mxu0
    %1179 = vmatpush.bf16.msra.mxu0 %v1004
    %1180 = vmatpush.bf16.msra.mxu0 %v1000
    %1181 = vmatpush.bf16.msra.mxu0 %v996
    %1182 = vmatpush.bf16.msra.mxu0 %v992
    %1183 = vmatpush.bf16.msra.mxu0 %v988
    %1184 = vmatpush.bf16.msra.mxu0 %v984
    %1185 = vmatpush.bf16.msra.mxu0 %v980
    %1186 = vmatpush.bf16.msra.mxu0 %v976
    %1187 = vmatmul.bf16.gmra.mxu0 %v175
    %v1188 = vpop.f32.mrf.mxu0
    %v1189 = vadd.f32 %v778, %v1188
    %v1190 = vpop.f32.mrf.mxu0
    %1191 = vdwg.mxu0
    %1192 = vmatpush.bf16.msra.mxu0 %v1036
    %1193 = vmatpush.bf16.msra.mxu0 %v1032
    %1194 = vmatpush.bf16.msra.mxu0 %v1028
    %1195 = vmatpush.bf16.msra.mxu0 %v1024
    %1196 = vmatpush.bf16.msra.mxu0 %v1020
    %1197 = vmatpush.bf16.msra.mxu0 %v1016
    %1198 = vmatpush.bf16.msra.mxu0 %v1012
    %1199 = vmatpush.bf16.msra.mxu0 %v1008
    %1200 = vmatmul.bf16.gmra.mxu0 %v176
    %v1201 = vpop.f32.mrf.mxu0
    %v1202 = vadd.f32 %v1189, %v1201
    %v1203 = vpop.f32.mrf.mxu0
    %1204 = vdwg.mxu0
    %v1205 = vld [vmem:[#allocation4 + $0x10] sm:$0xff]
    %v1206 = vld [vmem:[#allocation4 + $0x30] sm:$0x77]
    %v1207 = vld [vmem:[#allocation6 + $0x4] sm:$0x3]
    %v1209 = vperm.slane %v1207, 0
    %v1210 = vperm.slane %v1207, 1
    %v1215 = vunpack.c.l.b16 %v1205
    %v1216 = vunpack.c.h.b16 %v1205
    %v1217 = vunpack.c.l.b16 %v1206
    %v1218 = vunpack.c.h.b16 %v1206
    %v1219 = vpack.c.b16 %v1217, %v1215
    %v1220 = vpack.c.b16 %v1218, %v1216
    %v1222 = vand.u32 %v1219, %v140
    %v1225 = vand.u32 %v1220, %v140
    %1227 = vmatpush.bf16.msra.mxu0 0
    %1228 = vmatpush.bf16.msra.mxu0 0
    %1229 = vmatpush.bf16.msra.mxu0 0
    %1230 = vmatpush.bf16.msra.mxu0 0
    %1231 = vmatpush.bf16.msra.mxu0 0
    %1232 = vmatpush.bf16.msra.mxu0 0
    %1233 = vmatpush.bf16.msra.mxu0 0
    %1234 = vmatpush.bf16.msra.mxu0 %v1222
    %1235 = vmatmul.bf16.gmra.mxu0 %v135
    %v1236 = vpop.f32.mrf.mxu0
    %v1237 = vadd.f32 %v1209, %v1236
    %v1238 = vpop.f32.mrf.mxu0
    %1239 = vdwg.mxu0
    %1240 = vmatpush.bf16.msra.mxu0 0
    %1241 = vmatpush.bf16.msra.mxu0 0
    %1242 = vmatpush.bf16.msra.mxu0 0
    %1243 = vmatpush.bf16.msra.mxu0 0
    %1244 = vmatpush.bf16.msra.mxu0 0
    %1245 = vmatpush.bf16.msra.mxu0 0
    %1246 = vmatpush.bf16.msra.mxu0 0
    %1247 = vmatpush.bf16.msra.mxu0 %v1225
    %1248 = vmatmul.bf16.gmra.mxu0 %v135
    %v1249 = vpop.f32.mrf.mxu0
    %v1250 = vadd.f32 %v1210, %v1249
    %v1251 = vpop.f32.mrf.mxu0
    %1252 = vdwg.mxu0
    %v1253 = vmax.f32 %v1237, 0.0
    %v1254 = vmax.f32 %v1250, 0.0
    %v1255 = vpack.c.bf16 %v1253, %v1253
    %v1256 = vpack.c.bf16 %v1254, %v1254
    %v1257 = vld [vmem:[#allocation7 + $0x400] sm:$0xff]
    %v1258 = vld [vmem:[#allocation7 + $0x408] sm:$0xff]
    %v1259 = vld [vmem:[#allocation7 + $0x410] sm:$0xff]
    %v1260 = vld [vmem:[#allocation7 + $0x418] sm:$0xff]
    %v1261 = vld [vmem:[#allocation7 + $0x420] sm:$0xff]
    %v1262 = vld [vmem:[#allocation7 + $0x428] sm:$0xff]
    %v1263 = vld [vmem:[#allocation7 + $0x430] sm:$0xff]
    %v1264 = vld [vmem:[#allocation7 + $0x438] sm:$0xff]
    %v1265 = vld [vmem:[#allocation7 + $0x440] sm:$0xff]
    %v1266 = vld [vmem:[#allocation7 + $0x448] sm:$0xff]
    %v1267 = vld [vmem:[#allocation7 + $0x450] sm:$0xff]
    %v1268 = vld [vmem:[#allocation7 + $0x458] sm:$0xff]
    %v1269 = vld [vmem:[#allocation7 + $0x460] sm:$0xff]
    %v1270 = vld [vmem:[#allocation7 + $0x468] sm:$0xff]
    %v1271 = vld [vmem:[#allocation7 + $0x470] sm:$0xff]
    %v1272 = vld [vmem:[#allocation7 + $0x478] sm:$0xff]
    %v1273 = vld [vmem:[#allocation7 + $0x480] sm:$0xff]
    %v1274 = vld [vmem:[#allocation7 + $0x488] sm:$0xff]
    %v1275 = vld [vmem:[#allocation7 + $0x490] sm:$0xff]
    %v1276 = vld [vmem:[#allocation7 + $0x498] sm:$0xff]
    %v1277 = vld [vmem:[#allocation7 + $0x4a0] sm:$0xff]
    %v1278 = vld [vmem:[#allocation7 + $0x4a8] sm:$0xff]
    %v1279 = vld [vmem:[#allocation7 + $0x4b0] sm:$0xff]
    %v1280 = vld [vmem:[#allocation7 + $0x4b8] sm:$0xff]
    %v1281 = vld [vmem:[#allocation7 + $0x4c0] sm:$0xff]
    %v1282 = vld [vmem:[#allocation7 + $0x4c8] sm:$0xff]
    %v1283 = vld [vmem:[#allocation7 + $0x4d0] sm:$0xff]
    %v1284 = vld [vmem:[#allocation7 + $0x4d8] sm:$0xff]
    %v1285 = vld [vmem:[#allocation7 + $0x4e0] sm:$0xff]
    %v1286 = vld [vmem:[#allocation7 + $0x4e8] sm:$0xff]
    %v1287 = vld [vmem:[#allocation7 + $0x4f0] sm:$0xff]
    %v1288 = vld [vmem:[#allocation7 + $0x4f8] sm:$0xff]
    %v1289 = vld [vmem:[#allocation7 + $0x500] sm:$0xff]
    %v1290 = vld [vmem:[#allocation7 + $0x508] sm:$0xff]
    %v1291 = vld [vmem:[#allocation7 + $0x510] sm:$0xff]
    %v1292 = vld [vmem:[#allocation7 + $0x518] sm:$0xff]
    %v1293 = vld [vmem:[#allocation7 + $0x520] sm:$0xff]
    %v1294 = vld [vmem:[#allocation7 + $0x528] sm:$0xff]
    %v1295 = vld [vmem:[#allocation7 + $0x530] sm:$0xff]
    %v1296 = vld [vmem:[#allocation7 + $0x538] sm:$0xff]
    %v1297 = vld [vmem:[#allocation7 + $0x540] sm:$0xff]
    %v1298 = vld [vmem:[#allocation7 + $0x548] sm:$0xff]
    %v1299 = vld [vmem:[#allocation7 + $0x550] sm:$0xff]
    %v1300 = vld [vmem:[#allocation7 + $0x558] sm:$0xff]
    %v1301 = vld [vmem:[#allocation7 + $0x560] sm:$0xff]
    %v1302 = vld [vmem:[#allocation7 + $0x568] sm:$0xff]
    %v1303 = vld [vmem:[#allocation7 + $0x570] sm:$0xff]
    %v1304 = vld [vmem:[#allocation7 + $0x578] sm:$0xff]
    %v1305 = vld [vmem:[#allocation7 + $0x580] sm:$0xff]
    %v1306 = vld [vmem:[#allocation7 + $0x588] sm:$0xff]
    %v1307 = vld [vmem:[#allocation7 + $0x590] sm:$0xff]
    %v1308 = vld [vmem:[#allocation7 + $0x598] sm:$0xff]
    %v1309 = vld [vmem:[#allocation7 + $0x5a0] sm:$0xff]
    %v1310 = vld [vmem:[#allocation7 + $0x5a8] sm:$0xff]
    %v1311 = vld [vmem:[#allocation7 + $0x5b0] sm:$0xff]
    %v1312 = vld [vmem:[#allocation7 + $0x5b8] sm:$0xff]
    %v1313 = vld [vmem:[#allocation7 + $0x5c0] sm:$0xff]
    %v1314 = vld [vmem:[#allocation7 + $0x5c8] sm:$0xff]
    %v1315 = vld [vmem:[#allocation7 + $0x5d0] sm:$0xff]
    %v1316 = vld [vmem:[#allocation7 + $0x5d8] sm:$0xff]
    %v1317 = vld [vmem:[#allocation7 + $0x5e0] sm:$0xff]
    %v1318 = vld [vmem:[#allocation7 + $0x5e8] sm:$0xff]
    %v1319 = vld [vmem:[#allocation7 + $0x5f0] sm:$0xff]
    %v1320 = vld [vmem:[#allocation7 + $0x5f8] sm:$0xff]
    %v1385 = vunpack.c.l.b16 %v1257
    %v1386 = vunpack.c.h.b16 %v1257
    %v1387 = vunpack.c.l.b16 %v1258
    %v1388 = vunpack.c.h.b16 %v1258
    %v1389 = vunpack.c.l.b16 %v1259
    %v1390 = vunpack.c.h.b16 %v1259
    %v1391 = vunpack.c.l.b16 %v1260
    %v1392 = vunpack.c.h.b16 %v1260
    %v1393 = vunpack.c.l.b16 %v1261
    %v1394 = vunpack.c.h.b16 %v1261
    %v1395 = vunpack.c.l.b16 %v1262
    %v1396 = vunpack.c.h.b16 %v1262
    %v1397 = vunpack.c.l.b16 %v1263
    %v1398 = vunpack.c.h.b16 %v1263
    %v1399 = vunpack.c.l.b16 %v1264
    %v1400 = vunpack.c.h.b16 %v1264
    %v1401 = vunpack.c.l.b16 %v1265
    %v1402 = vunpack.c.h.b16 %v1265
    %v1403 = vunpack.c.l.b16 %v1266
    %v1404 = vunpack.c.h.b16 %v1266
    %v1405 = vunpack.c.l.b16 %v1267
    %v1406 = vunpack.c.h.b16 %v1267
    %v1407 = vunpack.c.l.b16 %v1268
    %v1408 = vunpack.c.h.b16 %v1268
    %v1409 = vunpack.c.l.b16 %v1269
    %v1410 = vunpack.c.h.b16 %v1269
    %v1411 = vunpack.c.l.b16 %v1270
    %v1412 = vunpack.c.h.b16 %v1270
    %v1413 = vunpack.c.l.b16 %v1271
    %v1414 = vunpack.c.h.b16 %v1271
    %v1415 = vunpack.c.l.b16 %v1272
    %v1416 = vunpack.c.h.b16 %v1272
    %v1417 = vunpack.c.l.b16 %v1273
    %v1418 = vunpack.c.h.b16 %v1273
    %v1419 = vunpack.c.l.b16 %v1274
    %v1420 = vunpack.c.h.b16 %v1274
    %v1421 = vunpack.c.l.b16 %v1275
    %v1422 = vunpack.c.h.b16 %v1275
    %v1423 = vunpack.c.l.b16 %v1276
    %v1424 = vunpack.c.h.b16 %v1276
    %v1425 = vunpack.c.l.b16 %v1277
    %v1426 = vunpack.c.h.b16 %v1277
    %v1427 = vunpack.c.l.b16 %v1278
    %v1428 = vunpack.c.h.b16 %v1278
    %v1429 = vunpack.c.l.b16 %v1279
    %v1430 = vunpack.c.h.b16 %v1279
    %v1431 = vunpack.c.l.b16 %v1280
    %v1432 = vunpack.c.h.b16 %v1280
    %v1433 = vunpack.c.l.b16 %v1281
    %v1434 = vunpack.c.h.b16 %v1281
    %v1435 = vunpack.c.l.b16 %v1282
    %v1436 = vunpack.c.h.b16 %v1282
    %v1437 = vunpack.c.l.b16 %v1283
    %v1438 = vunpack.c.h.b16 %v1283
    %v1439 = vunpack.c.l.b16 %v1284
    %v1440 = vunpack.c.h.b16 %v1284
    %v1441 = vunpack.c.l.b16 %v1285
    %v1442 = vunpack.c.h.b16 %v1285
    %v1443 = vunpack.c.l.b16 %v1286
    %v1444 = vunpack.c.h.b16 %v1286
    %v1445 = vunpack.c.l.b16 %v1287
    %v1446 = vunpack.c.h.b16 %v1287
    %v1447 = vunpack.c.l.b16 %v1288
    %v1448 = vunpack.c.h.b16 %v1288
    %v1449 = vunpack.c.l.b16 %v1289
    %v1450 = vunpack.c.h.b16 %v1289
    %v1451 = vunpack.c.l.b16 %v1290
    %v1452 = vunpack.c.h.b16 %v1290
    %v1453 = vunpack.c.l.b16 %v1291
    %v1454 = vunpack.c.h.b16 %v1291
    %v1455 = vunpack.c.l.b16 %v1292
    %v1456 = vunpack.c.h.b16 %v1292
    %v1457 = vunpack.c.l.b16 %v1293
    %v1458 = vunpack.c.h.b16 %v1293
    %v1459 = vunpack.c.l.b16 %v1294
    %v1460 = vunpack.c.h.b16 %v1294
    %v1461 = vunpack.c.l.b16 %v1295
    %v1462 = vunpack.c.h.b16 %v1295
    %v1463 = vunpack.c.l.b16 %v1296
    %v1464 = vunpack.c.h.b16 %v1296
    %v1465 = vunpack.c.l.b16 %v1297
    %v1466 = vunpack.c.h.b16 %v1297
    %v1467 = vunpack.c.l.b16 %v1298
    %v1468 = vunpack.c.h.b16 %v1298
    %v1469 = vunpack.c.l.b16 %v1299
    %v1470 = vunpack.c.h.b16 %v1299
    %v1471 = vunpack.c.l.b16 %v1300
    %v1472 = vunpack.c.h.b16 %v1300
    %v1473 = vunpack.c.l.b16 %v1301
    %v1474 = vunpack.c.h.b16 %v1301
    %v1475 = vunpack.c.l.b16 %v1302
    %v1476 = vunpack.c.h.b16 %v1302
    %v1477 = vunpack.c.l.b16 %v1303
    %v1478 = vunpack.c.h.b16 %v1303
    %v1479 = vunpack.c.l.b16 %v1304
    %v1480 = vunpack.c.h.b16 %v1304
    %v1481 = vunpack.c.l.b16 %v1305
    %v1482 = vunpack.c.h.b16 %v1305
    %v1483 = vunpack.c.l.b16 %v1306
    %v1484 = vunpack.c.h.b16 %v1306
    %v1485 = vunpack.c.l.b16 %v1307
    %v1486 = vunpack.c.h.b16 %v1307
    %v1487 = vunpack.c.l.b16 %v1308
    %v1488 = vunpack.c.h.b16 %v1308
    %v1489 = vunpack.c.l.b16 %v1309
    %v1490 = vunpack.c.h.b16 %v1309
    %v1491 = vunpack.c.l.b16 %v1310
    %v1492 = vunpack.c.h.b16 %v1310
    %v1493 = vunpack.c.l.b16 %v1311
    %v1494 = vunpack.c.h.b16 %v1311
    %v1495 = vunpack.c.l.b16 %v1312
    %v1496 = vunpack.c.h.b16 %v1312
    %v1497 = vunpack.c.l.b16 %v1313
    %v1498 = vunpack.c.h.b16 %v1313
    %v1499 = vunpack.c.l.b16 %v1314
    %v1500 = vunpack.c.h.b16 %v1314
    %v1501 = vunpack.c.l.b16 %v1315
    %v1502 = vunpack.c.h.b16 %v1315
    %v1503 = vunpack.c.l.b16 %v1316
    %v1504 = vunpack.c.h.b16 %v1316
    %v1505 = vunpack.c.l.b16 %v1317
    %v1506 = vunpack.c.h.b16 %v1317
    %v1507 = vunpack.c.l.b16 %v1318
    %v1508 = vunpack.c.h.b16 %v1318
    %v1509 = vunpack.c.l.b16 %v1319
    %v1510 = vunpack.c.h.b16 %v1319
    %v1511 = vunpack.c.l.b16 %v1320
    %v1512 = vunpack.c.h.b16 %v1320
    %v1513 = vpack.c.b16 %v1389, %v1385
    %v1514 = vpack.c.b16 %v1390, %v1386
    %v1515 = vpack.c.b16 %v1391, %v1387
    %v1516 = vpack.c.b16 %v1392, %v1388
    %v1517 = vpack.c.b16 %v1397, %v1393
    %v1518 = vpack.c.b16 %v1398, %v1394
    %v1519 = vpack.c.b16 %v1399, %v1395
    %v1520 = vpack.c.b16 %v1400, %v1396
    %v1521 = vpack.c.b16 %v1405, %v1401
    %v1522 = vpack.c.b16 %v1406, %v1402
    %v1523 = vpack.c.b16 %v1407, %v1403
    %v1524 = vpack.c.b16 %v1408, %v1404
    %v1525 = vpack.c.b16 %v1413, %v1409
    %v1526 = vpack.c.b16 %v1414, %v1410
    %v1527 = vpack.c.b16 %v1415, %v1411
    %v1528 = vpack.c.b16 %v1416, %v1412
    %v1529 = vpack.c.b16 %v1421, %v1417
    %v1530 = vpack.c.b16 %v1422, %v1418
    %v1531 = vpack.c.b16 %v1423, %v1419
    %v1532 = vpack.c.b16 %v1424, %v1420
    %v1533 = vpack.c.b16 %v1429, %v1425
    %v1534 = vpack.c.b16 %v1430, %v1426
    %v1535 = vpack.c.b16 %v1431, %v1427
    %v1536 = vpack.c.b16 %v1432, %v1428
    %v1537 = vpack.c.b16 %v1437, %v1433
    %v1538 = vpack.c.b16 %v1438, %v1434
    %v1539 = vpack.c.b16 %v1439, %v1435
    %v1540 = vpack.c.b16 %v1440, %v1436
    %v1541 = vpack.c.b16 %v1445, %v1441
    %v1542 = vpack.c.b16 %v1446, %v1442
    %v1543 = vpack.c.b16 %v1447, %v1443
    %v1544 = vpack.c.b16 %v1448, %v1444
    %v1545 = vpack.c.b16 %v1453, %v1449
    %v1546 = vpack.c.b16 %v1454, %v1450
    %v1547 = vpack.c.b16 %v1455, %v1451
    %v1548 = vpack.c.b16 %v1456, %v1452
    %v1549 = vpack.c.b16 %v1461, %v1457
    %v1550 = vpack.c.b16 %v1462, %v1458
    %v1551 = vpack.c.b16 %v1463, %v1459
    %v1552 = vpack.c.b16 %v1464, %v1460
    %v1553 = vpack.c.b16 %v1469, %v1465
    %v1554 = vpack.c.b16 %v1470, %v1466
    %v1555 = vpack.c.b16 %v1471, %v1467
    %v1556 = vpack.c.b16 %v1472, %v1468
    %v1557 = vpack.c.b16 %v1477, %v1473
    %v1558 = vpack.c.b16 %v1478, %v1474
    %v1559 = vpack.c.b16 %v1479, %v1475
    %v1560 = vpack.c.b16 %v1480, %v1476
    %v1561 = vpack.c.b16 %v1485, %v1481
    %v1562 = vpack.c.b16 %v1486, %v1482
    %v1563 = vpack.c.b16 %v1487, %v1483
    %v1564 = vpack.c.b16 %v1488, %v1484
    %v1565 = vpack.c.b16 %v1493, %v1489
    %v1566 = vpack.c.b16 %v1494, %v1490
    %v1567 = vpack.c.b16 %v1495, %v1491
    %v1568 = vpack.c.b16 %v1496, %v1492
    %v1569 = vpack.c.b16 %v1501, %v1497
    %v1570 = vpack.c.b16 %v1502, %v1498
    %v1571 = vpack.c.b16 %v1503, %v1499
    %v1572 = vpack.c.b16 %v1504, %v1500
    %v1573 = vpack.c.b16 %v1509, %v1505
    %v1574 = vpack.c.b16 %v1510, %v1506
    %v1575 = vpack.c.b16 %v1511, %v1507
    %v1576 = vpack.c.b16 %v1512, %v1508
    %1641 = vmatpush.bf16.msra.mxu0 %v1541
    %1642 = vmatpush.bf16.msra.mxu0 %v1537
    %1643 = vmatpush.bf16.msra.mxu0 %v1533
    %1644 = vmatpush.bf16.msra.mxu0 %v1529
    %1645 = vmatpush.bf16.msra.mxu0 %v1525
    %1646 = vmatpush.bf16.msra.mxu0 %v1521
    %1647 = vmatpush.bf16.msra.mxu0 %v1517
    %1648 = vmatpush.bf16.msra.mxu0 %v1513
    %1649 = vmatmul.bf16.gmra.mxu0 %v1255
    %v1650 = vpop.f32.mrf.mxu0
    %v1651 = vadd.f32 0.0, %v1650
    %v1652 = vpop.f32.mrf.mxu0
    %1653 = vdwg.mxu0
    %1654 = vmatpush.bf16.msra.mxu0 %v1573
    %1655 = vmatpush.bf16.msra.mxu0 %v1569
    %1656 = vmatpush.bf16.msra.mxu0 %v1565
    %1657 = vmatpush.bf16.msra.mxu0 %v1561
    %1658 = vmatpush.bf16.msra.mxu0 %v1557
    %1659 = vmatpush.bf16.msra.mxu0 %v1553
    %1660 = vmatpush.bf16.msra.mxu0 %v1549
    %1661 = vmatpush.bf16.msra.mxu0 %v1545
    %1662 = vmatmul.bf16.gmra.mxu0 %v1256
    %v1663 = vpop.f32.mrf.mxu0
    %v1664 = vadd.f32 %v1651, %v1663
    %v1665 = vpop.f32.mrf.mxu0
    %1666 = vdwg.mxu0
    %1667 = vmatpush.bf16.msra.mxu0 %v1542
    %1668 = vmatpush.bf16.msra.mxu0 %v1538
    %1669 = vmatpush.bf16.msra.mxu0 %v1534
    %1670 = vmatpush.bf16.msra.mxu0 %v1530
    %1671 = vmatpush.bf16.msra.mxu0 %v1526
    %1672 = vmatpush.bf16.msra.mxu0 %v1522
    %1673 = vmatpush.bf16.msra.mxu0 %v1518
    %1674 = vmatpush.bf16.msra.mxu0 %v1514
    %1675 = vmatmul.bf16.gmra.mxu0 %v1255
    %v1676 = vpop.f32.mrf.mxu0
    %v1677 = vadd.f32 0.0, %v1676
    %v1678 = vpop.f32.mrf.mxu0
    %1679 = vdwg.mxu0
    %1680 = vmatpush.bf16.msra.mxu0 %v1574
    %1681 = vmatpush.bf16.msra.mxu0 %v1570
    %1682 = vmatpush.bf16.msra.mxu0 %v1566
    %1683 = vmatpush.bf16.msra.mxu0 %v1562
    %1684 = vmatpush.bf16.msra.mxu0 %v1558
    %1685 = vmatpush.bf16.msra.mxu0 %v1554
    %1686 = vmatpush.bf16.msra.mxu0 %v1550
    %1687 = vmatpush.bf16.msra.mxu0 %v1546
    %1688 = vmatmul.bf16.gmra.mxu0 %v1256
    %v1689 = vpop.f32.mrf.mxu0
    %v1690 = vadd.f32 %v1677, %v1689
    %v1691 = vpop.f32.mrf.mxu0
    %1692 = vdwg.mxu0
    %1693 = vmatpush.bf16.msra.mxu0 %v1543
    %1694 = vmatpush.bf16.msra.mxu0 %v1539
    %1695 = vmatpush.bf16.msra.mxu0 %v1535
    %1696 = vmatpush.bf16.msra.mxu0 %v1531
    %1697 = vmatpush.bf16.msra.mxu0 %v1527
    %1698 = vmatpush.bf16.msra.mxu0 %v1523
    %1699 = vmatpush.bf16.msra.mxu0 %v1519
    %1700 = vmatpush.bf16.msra.mxu0 %v1515
    %1701 = vmatmul.bf16.gmra.mxu0 %v1255
    %v1702 = vpop.f32.mrf.mxu0
    %v1703 = vadd.f32 0.0, %v1702
    %v1704 = vpop.f32.mrf.mxu0
    %1705 = vdwg.mxu0
    %1706 = vmatpush.bf16.msra.mxu0 %v1575
    %1707 = vmatpush.bf16.msra.mxu0 %v1571
    %1708 = vmatpush.bf16.msra.mxu0 %v1567
    %1709 = vmatpush.bf16.msra.mxu0 %v1563
    %1710 = vmatpush.bf16.msra.mxu0 %v1559
    %1711 = vmatpush.bf16.msra.mxu0 %v1555
    %1712 = vmatpush.bf16.msra.mxu0 %v1551
    %1713 = vmatpush.bf16.msra.mxu0 %v1547
    %1714 = vmatmul.bf16.gmra.mxu0 %v1256
    %v1715 = vpop.f32.mrf.mxu0
    %v1716 = vadd.f32 %v1703, %v1715
    %v1717 = vpop.f32.mrf.mxu0
    %1718 = vdwg.mxu0
    %1719 = vmatpush.bf16.msra.mxu0 %v1544
    %1720 = vmatpush.bf16.msra.mxu0 %v1540
    %1721 = vmatpush.bf16.msra.mxu0 %v1536
    %1722 = vmatpush.bf16.msra.mxu0 %v1532
    %1723 = vmatpush.bf16.msra.mxu0 %v1528
    %1724 = vmatpush.bf16.msra.mxu0 %v1524
    %1725 = vmatpush.bf16.msra.mxu0 %v1520
    %1726 = vmatpush.bf16.msra.mxu0 %v1516
    %1727 = vmatmul.bf16.gmra.mxu0 %v1255
    %v1728 = vpop.f32.mrf.mxu0
    %v1729 = vadd.f32 0.0, %v1728
    %v1730 = vpop.f32.mrf.mxu0
    %1731 = vdwg.mxu0
    %1732 = vmatpush.bf16.msra.mxu0 %v1576
    %1733 = vmatpush.bf16.msra.mxu0 %v1572
    %1734 = vmatpush.bf16.msra.mxu0 %v1568
    %1735 = vmatpush.bf16.msra.mxu0 %v1564
    %1736 = vmatpush.bf16.msra.mxu0 %v1560
    %1737 = vmatpush.bf16.msra.mxu0 %v1556
    %1738 = vmatpush.bf16.msra.mxu0 %v1552
    %1739 = vmatpush.bf16.msra.mxu0 %v1548
    %1740 = vmatmul.bf16.gmra.mxu0 %v1256
    %v1741 = vpop.f32.mrf.mxu0
    %v1742 = vadd.f32 %v1729, %v1741
    %v1743 = vpop.f32.mrf.mxu0
    %1744 = vdwg.mxu0
    %v1745 = vadd.f32 %v1124, %v1664
    %v1746 = vadd.f32 %v1150, %v1690
    %v1747 = vadd.f32 %v1176, %v1716
    %v1748 = vadd.f32 %v1202, %v1742
    %v1749 = vld [vmem:[#allocation4 + $0x18] sm:$0xff]
    %v1750 = vld [vmem:[#allocation4 + $0x38] sm:$0x77]
    %v1751 = vld [vmem:[#allocation6 + $0x6] sm:$0x3]
    %v1753 = vperm.slane %v1751, 0
    %v1754 = vperm.slane %v1751, 1
    %v1759 = vunpack.c.l.b16 %v1749
    %v1760 = vunpack.c.h.b16 %v1749
    %v1761 = vunpack.c.l.b16 %v1750
    %v1762 = vunpack.c.h.b16 %v1750
    %v1763 = vpack.c.b16 %v1761, %v1759
    %v1764 = vpack.c.b16 %v1762, %v1760
    %v1766 = vand.u32 %v1763, %v140
    %v1769 = vand.u32 %v1764, %v140
    %1771 = vmatpush.bf16.msra.mxu0 0
    %1772 = vmatpush.bf16.msra.mxu0 0
    %1773 = vmatpush.bf16.msra.mxu0 0
    %1774 = vmatpush.bf16.msra.mxu0 0
    %1775 = vmatpush.bf16.msra.mxu0 0
    %1776 = vmatpush.bf16.msra.mxu0 0
    %1777 = vmatpush.bf16.msra.mxu0 0
    %1778 = vmatpush.bf16.msra.mxu0 %v1766
    %1779 = vmatmul.bf16.gmra.mxu0 %v135
    %v1780 = vpop.f32.mrf.mxu0
    %v1781 = vadd.f32 %v1753, %v1780
    %v1782 = vpop.f32.mrf.mxu0
    %1783 = vdwg.mxu0
    %1784 = vmatpush.bf16.msra.mxu0 0
    %1785 = vmatpush.bf16.msra.mxu0 0
    %1786 = vmatpush.bf16.msra.mxu0 0
    %1787 = vmatpush.bf16.msra.mxu0 0
    %1788 = vmatpush.bf16.msra.mxu0 0
    %1789 = vmatpush.bf16.msra.mxu0 0
    %1790 = vmatpush.bf16.msra.mxu0 0
    %1791 = vmatpush.bf16.msra.mxu0 %v1769
    %1792 = vmatmul.bf16.gmra.mxu0 %v135
    %v1793 = vpop.f32.mrf.mxu0
    %v1794 = vadd.f32 %v1754, %v1793
    %v1795 = vpop.f32.mrf.mxu0
    %1796 = vdwg.mxu0
    %v1797 = vmax.f32 %v1781, 0.0
    %v1798 = vmax.f32 %v1794, 0.0
    %v1799 = vpack.c.bf16 %v1797, %v1797
    %v1800 = vpack.c.bf16 %v1798, %v1798
    %v1801 = vld [vmem:[#allocation7 + $0x600] sm:$0xff]
    %v1802 = vld [vmem:[#allocation7 + $0x608] sm:$0xff]
    %v1803 = vld [vmem:[#allocation7 + $0x610] sm:$0xff]
    %v1804 = vld [vmem:[#allocation7 + $0x618] sm:$0xff]
    %v1805 = vld [vmem:[#allocation7 + $0x620] sm:$0xff]
    %v1806 = vld [vmem:[#allocation7 + $0x628] sm:$0xff]
    %v1807 = vld [vmem:[#allocation7 + $0x630] sm:$0xff]
    %v1808 = vld [vmem:[#allocation7 + $0x638] sm:$0xff]
    %v1809 = vld [vmem:[#allocation7 + $0x640] sm:$0xff]
    %v1810 = vld [vmem:[#allocation7 + $0x648] sm:$0xff]
    %v1811 = vld [vmem:[#allocation7 + $0x650] sm:$0xff]
    %v1812 = vld [vmem:[#allocation7 + $0x658] sm:$0xff]
    %v1813 = vld [vmem:[#allocation7 + $0x660] sm:$0xff]
    %v1814 = vld [vmem:[#allocation7 + $0x668] sm:$0xff]
    %v1815 = vld [vmem:[#allocation7 + $0x670] sm:$0xff]
    %v1816 = vld [vmem:[#allocation7 + $0x678] sm:$0xff]
    %v1817 = vld [vmem:[#allocation7 + $0x680] sm:$0xff]
    %v1818 = vld [vmem:[#allocation7 + $0x688] sm:$0xff]
    %v1819 = vld [vmem:[#allocation7 + $0x690] sm:$0xff]
    %v1820 = vld [vmem:[#allocation7 + $0x698] sm:$0xff]
    %v1821 = vld [vmem:[#allocation7 + $0x6a0] sm:$0xff]
    %v1822 = vld [vmem:[#allocation7 + $0x6a8] sm:$0xff]
    %v1823 = vld [vmem:[#allocation7 + $0x6b0] sm:$0xff]
    %v1824 = vld [vmem:[#allocation7 + $0x6b8] sm:$0xff]
    %v1825 = vld [vmem:[#allocation7 + $0x6c0] sm:$0xff]
    %v1826 = vld [vmem:[#allocation7 + $0x6c8] sm:$0xff]
    %v1827 = vld [vmem:[#allocation7 + $0x6d0] sm:$0xff]
    %v1828 = vld [vmem:[#allocation7 + $0x6d8] sm:$0xff]
    %v1829 = vld [vmem:[#allocation7 + $0x6e0] sm:$0xff]
    %v1830 = vld [vmem:[#allocation7 + $0x6e8] sm:$0xff]
    %v1831 = vld [vmem:[#allocation7 + $0x6f0] sm:$0xff]
    %v1832 = vld [vmem:[#allocation7 + $0x6f8] sm:$0xff]
    %v1833 = vld [vmem:[#allocation7 + $0x700] sm:$0xff]
    %v1834 = vld [vmem:[#allocation7 + $0x708] sm:$0xff]
    %v1835 = vld [vmem:[#allocation7 + $0x710] sm:$0xff]
    %v1836 = vld [vmem:[#allocation7 + $0x718] sm:$0xff]
    %v1837 = vld [vmem:[#allocation7 + $0x720] sm:$0xff]
    %v1838 = vld [vmem:[#allocation7 + $0x728] sm:$0xff]
    %v1839 = vld [vmem:[#allocation7 + $0x730] sm:$0xff]
    %v1840 = vld [vmem:[#allocation7 + $0x738] sm:$0xff]
    %v1841 = vld [vmem:[#allocation7 + $0x740] sm:$0xff]
    %v1842 = vld [vmem:[#allocation7 + $0x748] sm:$0xff]
    %v1843 = vld [vmem:[#allocation7 + $0x750] sm:$0xff]
    %v1844 = vld [vmem:[#allocation7 + $0x758] sm:$0xff]
    %v1845 = vld [vmem:[#allocation7 + $0x760] sm:$0xff]
    %v1846 = vld [vmem:[#allocation7 + $0x768] sm:$0xff]
    %v1847 = vld [vmem:[#allocation7 + $0x770] sm:$0xff]
    %v1848 = vld [vmem:[#allocation7 + $0x778] sm:$0xff]
    %v1849 = vld [vmem:[#allocation7 + $0x780] sm:$0xff]
    %v1850 = vld [vmem:[#allocation7 + $0x788] sm:$0xff]
    %v1851 = vld [vmem:[#allocation7 + $0x790] sm:$0xff]
    %v1852 = vld [vmem:[#allocation7 + $0x798] sm:$0xff]
    %v1853 = vld [vmem:[#allocation7 + $0x7a0] sm:$0xff]
    %v1854 = vld [vmem:[#allocation7 + $0x7a8] sm:$0xff]
    %v1855 = vld [vmem:[#allocation7 + $0x7b0] sm:$0xff]
    %v1856 = vld [vmem:[#allocation7 + $0x7b8] sm:$0xff]
    %v1857 = vld [vmem:[#allocation7 + $0x7c0] sm:$0xff]
    %v1858 = vld [vmem:[#allocation7 + $0x7c8] sm:$0xff]
    %v1859 = vld [vmem:[#allocation7 + $0x7d0] sm:$0xff]
    %v1860 = vld [vmem:[#allocation7 + $0x7d8] sm:$0xff]
    %v1861 = vld [vmem:[#allocation7 + $0x7e0] sm:$0xff]
    %v1862 = vld [vmem:[#allocation7 + $0x7e8] sm:$0xff]
    %v1863 = vld [vmem:[#allocation7 + $0x7f0] sm:$0xff]
    %v1864 = vld [vmem:[#allocation7 + $0x7f8] sm:$0xff]
    %v1929 = vunpack.c.l.b16 %v1801
    %v1930 = vunpack.c.h.b16 %v1801
    %v1931 = vunpack.c.l.b16 %v1802
    %v1932 = vunpack.c.h.b16 %v1802
    %v1933 = vunpack.c.l.b16 %v1803
    %v1934 = vunpack.c.h.b16 %v1803
    %v1935 = vunpack.c.l.b16 %v1804
    %v1936 = vunpack.c.h.b16 %v1804
    %v1937 = vunpack.c.l.b16 %v1805
    %v1938 = vunpack.c.h.b16 %v1805
    %v1939 = vunpack.c.l.b16 %v1806
    %v1940 = vunpack.c.h.b16 %v1806
    %v1941 = vunpack.c.l.b16 %v1807
    %v1942 = vunpack.c.h.b16 %v1807
    %v1943 = vunpack.c.l.b16 %v1808
    %v1944 = vunpack.c.h.b16 %v1808
    %v1945 = vunpack.c.l.b16 %v1809
    %v1946 = vunpack.c.h.b16 %v1809
    %v1947 = vunpack.c.l.b16 %v1810
    %v1948 = vunpack.c.h.b16 %v1810
    %v1949 = vunpack.c.l.b16 %v1811
    %v1950 = vunpack.c.h.b16 %v1811
    %v1951 = vunpack.c.l.b16 %v1812
    %v1952 = vunpack.c.h.b16 %v1812
    %v1953 = vunpack.c.l.b16 %v1813
    %v1954 = vunpack.c.h.b16 %v1813
    %v1955 = vunpack.c.l.b16 %v1814
    %v1956 = vunpack.c.h.b16 %v1814
    %v1957 = vunpack.c.l.b16 %v1815
    %v1958 = vunpack.c.h.b16 %v1815
    %v1959 = vunpack.c.l.b16 %v1816
    %v1960 = vunpack.c.h.b16 %v1816
    %v1961 = vunpack.c.l.b16 %v1817
    %v1962 = vunpack.c.h.b16 %v1817
    %v1963 = vunpack.c.l.b16 %v1818
    %v1964 = vunpack.c.h.b16 %v1818
    %v1965 = vunpack.c.l.b16 %v1819
    %v1966 = vunpack.c.h.b16 %v1819
    %v1967 = vunpack.c.l.b16 %v1820
    %v1968 = vunpack.c.h.b16 %v1820
    %v1969 = vunpack.c.l.b16 %v1821
    %v1970 = vunpack.c.h.b16 %v1821
    %v1971 = vunpack.c.l.b16 %v1822
    %v1972 = vunpack.c.h.b16 %v1822
    %v1973 = vunpack.c.l.b16 %v1823
    %v1974 = vunpack.c.h.b16 %v1823
    %v1975 = vunpack.c.l.b16 %v1824
    %v1976 = vunpack.c.h.b16 %v1824
    %v1977 = vunpack.c.l.b16 %v1825
    %v1978 = vunpack.c.h.b16 %v1825
    %v1979 = vunpack.c.l.b16 %v1826
    %v1980 = vunpack.c.h.b16 %v1826
    %v1981 = vunpack.c.l.b16 %v1827
    %v1982 = vunpack.c.h.b16 %v1827
    %v1983 = vunpack.c.l.b16 %v1828
    %v1984 = vunpack.c.h.b16 %v1828
    %v1985 = vunpack.c.l.b16 %v1829
    %v1986 = vunpack.c.h.b16 %v1829
    %v1987 = vunpack.c.l.b16 %v1830
    %v1988 = vunpack.c.h.b16 %v1830
    %v1989 = vunpack.c.l.b16 %v1831
    %v1990 = vunpack.c.h.b16 %v1831
    %v1991 = vunpack.c.l.b16 %v1832
    %v1992 = vunpack.c.h.b16 %v1832
    %v1993 = vunpack.c.l.b16 %v1833
    %v1994 = vunpack.c.h.b16 %v1833
    %v1995 = vunpack.c.l.b16 %v1834
    %v1996 = vunpack.c.h.b16 %v1834
    %v1997 = vunpack.c.l.b16 %v1835
    %v1998 = vunpack.c.h.b16 %v1835
    %v1999 = vunpack.c.l.b16 %v1836
    %v2000 = vunpack.c.h.b16 %v1836
    %v2001 = vunpack.c.l.b16 %v1837
    %v2002 = vunpack.c.h.b16 %v1837
    %v2003 = vunpack.c.l.b16 %v1838
    %v2004 = vunpack.c.h.b16 %v1838
    %v2005 = vunpack.c.l.b16 %v1839
    %v2006 = vunpack.c.h.b16 %v1839
    %v2007 = vunpack.c.l.b16 %v1840
    %v2008 = vunpack.c.h.b16 %v1840
    %v2009 = vunpack.c.l.b16 %v1841
    %v2010 = vunpack.c.h.b16 %v1841
    %v2011 = vunpack.c.l.b16 %v1842
    %v2012 = vunpack.c.h.b16 %v1842
    %v2013 = vunpack.c.l.b16 %v1843
    %v2014 = vunpack.c.h.b16 %v1843
    %v2015 = vunpack.c.l.b16 %v1844
    %v2016 = vunpack.c.h.b16 %v1844
    %v2017 = vunpack.c.l.b16 %v1845
    %v2018 = vunpack.c.h.b16 %v1845
    %v2019 = vunpack.c.l.b16 %v1846
    %v2020 = vunpack.c.h.b16 %v1846
    %v2021 = vunpack.c.l.b16 %v1847
    %v2022 = vunpack.c.h.b16 %v1847
    %v2023 = vunpack.c.l.b16 %v1848
    %v2024 = vunpack.c.h.b16 %v1848
    %v2025 = vunpack.c.l.b16 %v1849
    %v2026 = vunpack.c.h.b16 %v1849
    %v2027 = vunpack.c.l.b16 %v1850
    %v2028 = vunpack.c.h.b16 %v1850
    %v2029 = vunpack.c.l.b16 %v1851
    %v2030 = vunpack.c.h.b16 %v1851
    %v2031 = vunpack.c.l.b16 %v1852
    %v2032 = vunpack.c.h.b16 %v1852
    %v2033 = vunpack.c.l.b16 %v1853
    %v2034 = vunpack.c.h.b16 %v1853
    %v2035 = vunpack.c.l.b16 %v1854
    %v2036 = vunpack.c.h.b16 %v1854
    %v2037 = vunpack.c.l.b16 %v1855
    %v2038 = vunpack.c.h.b16 %v1855
    %v2039 = vunpack.c.l.b16 %v1856
    %v2040 = vunpack.c.h.b16 %v1856
    %v2041 = vunpack.c.l.b16 %v1857
    %v2042 = vunpack.c.h.b16 %v1857
    %v2043 = vunpack.c.l.b16 %v1858
    %v2044 = vunpack.c.h.b16 %v1858
    %v2045 = vunpack.c.l.b16 %v1859
    %v2046 = vunpack.c.h.b16 %v1859
    %v2047 = vunpack.c.l.b16 %v1860
    %v2048 = vunpack.c.h.b16 %v1860
    %v2049 = vunpack.c.l.b16 %v1861
    %v2050 = vunpack.c.h.b16 %v1861
    %v2051 = vunpack.c.l.b16 %v1862
    %v2052 = vunpack.c.h.b16 %v1862
    %v2053 = vunpack.c.l.b16 %v1863
    %v2054 = vunpack.c.h.b16 %v1863
    %v2055 = vunpack.c.l.b16 %v1864
    %v2056 = vunpack.c.h.b16 %v1864
    %v2057 = vpack.c.b16 %v1933, %v1929
    %v2058 = vpack.c.b16 %v1934, %v1930
    %v2059 = vpack.c.b16 %v1935, %v1931
    %v2060 = vpack.c.b16 %v1936, %v1932
    %v2061 = vpack.c.b16 %v1941, %v1937
    %v2062 = vpack.c.b16 %v1942, %v1938
    %v2063 = vpack.c.b16 %v1943, %v1939
    %v2064 = vpack.c.b16 %v1944, %v1940
    %v2065 = vpack.c.b16 %v1949, %v1945
    %v2066 = vpack.c.b16 %v1950, %v1946
    %v2067 = vpack.c.b16 %v1951, %v1947
    %v2068 = vpack.c.b16 %v1952, %v1948
    %v2069 = vpack.c.b16 %v1957, %v1953
    %v2070 = vpack.c.b16 %v1958, %v1954
    %v2071 = vpack.c.b16 %v1959, %v1955
    %v2072 = vpack.c.b16 %v1960, %v1956
    %v2073 = vpack.c.b16 %v1965, %v1961
    %v2074 = vpack.c.b16 %v1966, %v1962
    %v2075 = vpack.c.b16 %v1967, %v1963
    %v2076 = vpack.c.b16 %v1968, %v1964
    %v2077 = vpack.c.b16 %v1973, %v1969
    %v2078 = vpack.c.b16 %v1974, %v1970
    %v2079 = vpack.c.b16 %v1975, %v1971
    %v2080 = vpack.c.b16 %v1976, %v1972
    %v2081 = vpack.c.b16 %v1981, %v1977
    %v2082 = vpack.c.b16 %v1982, %v1978
    %v2083 = vpack.c.b16 %v1983, %v1979
    %v2084 = vpack.c.b16 %v1984, %v1980
    %v2085 = vpack.c.b16 %v1989, %v1985
    %v2086 = vpack.c.b16 %v1990, %v1986
    %v2087 = vpack.c.b16 %v1991, %v1987
    %v2088 = vpack.c.b16 %v1992, %v1988
    %v2089 = vpack.c.b16 %v1997, %v1993
    %v2090 = vpack.c.b16 %v1998, %v1994
    %v2091 = vpack.c.b16 %v1999, %v1995
    %v2092 = vpack.c.b16 %v2000, %v1996
    %v2093 = vpack.c.b16 %v2005, %v2001
    %v2094 = vpack.c.b16 %v2006, %v2002
    %v2095 = vpack.c.b16 %v2007, %v2003
    %v2096 = vpack.c.b16 %v2008, %v2004
    %v2097 = vpack.c.b16 %v2013, %v2009
    %v2098 = vpack.c.b16 %v2014, %v2010
    %v2099 = vpack.c.b16 %v2015, %v2011
    %v2100 = vpack.c.b16 %v2016, %v2012
    %v2101 = vpack.c.b16 %v2021, %v2017
    %v2102 = vpack.c.b16 %v2022, %v2018
    %v2103 = vpack.c.b16 %v2023, %v2019
    %v2104 = vpack.c.b16 %v2024, %v2020
    %v2105 = vpack.c.b16 %v2029, %v2025
    %v2106 = vpack.c.b16 %v2030, %v2026
    %v2107 = vpack.c.b16 %v2031, %v2027
    %v2108 = vpack.c.b16 %v2032, %v2028
    %v2109 = vpack.c.b16 %v2037, %v2033
    %v2110 = vpack.c.b16 %v2038, %v2034
    %v2111 = vpack.c.b16 %v2039, %v2035
    %v2112 = vpack.c.b16 %v2040, %v2036
    %v2113 = vpack.c.b16 %v2045, %v2041
    %v2114 = vpack.c.b16 %v2046, %v2042
    %v2115 = vpack.c.b16 %v2047, %v2043
    %v2116 = vpack.c.b16 %v2048, %v2044
    %v2117 = vpack.c.b16 %v2053, %v2049
    %v2118 = vpack.c.b16 %v2054, %v2050
    %v2119 = vpack.c.b16 %v2055, %v2051
    %v2120 = vpack.c.b16 %v2056, %v2052
    %2185 = vmatpush.bf16.msra.mxu0 %v2085
    %2186 = vmatpush.bf16.msra.mxu0 %v2081
    %2187 = vmatpush.bf16.msra.mxu0 %v2077
    %2188 = vmatpush.bf16.msra.mxu0 %v2073
    %2189 = vmatpush.bf16.msra.mxu0 %v2069
    %2190 = vmatpush.bf16.msra.mxu0 %v2065
    %2191 = vmatpush.bf16.msra.mxu0 %v2061
    %2192 = vmatpush.bf16.msra.mxu0 %v2057
    %2193 = vmatmul.bf16.gmra.mxu0 %v1799
    %v2194 = vpop.f32.mrf.mxu0
    %v2195 = vadd.f32 0.0, %v2194
    %v2196 = vpop.f32.mrf.mxu0
    %2197 = vdwg.mxu0
    %2198 = vmatpush.bf16.msra.mxu0 %v2117
    %2199 = vmatpush.bf16.msra.mxu0 %v2113
    %2200 = vmatpush.bf16.msra.mxu0 %v2109
    %2201 = vmatpush.bf16.msra.mxu0 %v2105
    %2202 = vmatpush.bf16.msra.mxu0 %v2101
    %2203 = vmatpush.bf16.msra.mxu0 %v2097
    %2204 = vmatpush.bf16.msra.mxu0 %v2093
    %2205 = vmatpush.bf16.msra.mxu0 %v2089
    %2206 = vmatmul.bf16.gmra.mxu0 %v1800
    %v2207 = vpop.f32.mrf.mxu0
    %v2208 = vadd.f32 %v2195, %v2207
    %v2209 = vpop.f32.mrf.mxu0
    %2210 = vdwg.mxu0
    %2211 = vmatpush.bf16.msra.mxu0 %v2086
    %2212 = vmatpush.bf16.msra.mxu0 %v2082
    %2213 = vmatpush.bf16.msra.mxu0 %v2078
    %2214 = vmatpush.bf16.msra.mxu0 %v2074
    %2215 = vmatpush.bf16.msra.mxu0 %v2070
    %2216 = vmatpush.bf16.msra.mxu0 %v2066
    %2217 = vmatpush.bf16.msra.mxu0 %v2062
    %2218 = vmatpush.bf16.msra.mxu0 %v2058
    %2219 = vmatmul.bf16.gmra.mxu0 %v1799
    %v2220 = vpop.f32.mrf.mxu0
    %v2221 = vadd.f32 0.0, %v2220
    %v2222 = vpop.f32.mrf.mxu0
    %2223 = vdwg.mxu0
    %2224 = vmatpush.bf16.msra.mxu0 %v2118
    %2225 = vmatpush.bf16.msra.mxu0 %v2114
    %2226 = vmatpush.bf16.msra.mxu0 %v2110
    %2227 = vmatpush.bf16.msra.mxu0 %v2106
    %2228 = vmatpush.bf16.msra.mxu0 %v2102
    %2229 = vmatpush.bf16.msra.mxu0 %v2098
    %2230 = vmatpush.bf16.msra.mxu0 %v2094
    %2231 = vmatpush.bf16.msra.mxu0 %v2090
    %2232 = vmatmul.bf16.gmra.mxu0 %v1800
    %v2233 = vpop.f32.mrf.mxu0
    %v2234 = vadd.f32 %v2221, %v2233
    %v2235 = vpop.f32.mrf.mxu0
    %2236 = vdwg.mxu0
    %2237 = vmatpush.bf16.msra.mxu0 %v2087
    %2238 = vmatpush.bf16.msra.mxu0 %v2083
    %2239 = vmatpush.bf16.msra.mxu0 %v2079
    %2240 = vmatpush.bf16.msra.mxu0 %v2075
    %2241 = vmatpush.bf16.msra.mxu0 %v2071
    %2242 = vmatpush.bf16.msra.mxu0 %v2067
    %2243 = vmatpush.bf16.msra.mxu0 %v2063
    %2244 = vmatpush.bf16.msra.mxu0 %v2059
    %2245 = vmatmul.bf16.gmra.mxu0 %v1799
    %v2246 = vpop.f32.mrf.mxu0
    %v2247 = vadd.f32 0.0, %v2246
    %v2248 = vpop.f32.mrf.mxu0
    %2249 = vdwg.mxu0
    %2250 = vmatpush.bf16.msra.mxu0 %v2119
    %2251 = vmatpush.bf16.msra.mxu0 %v2115
    %2252 = vmatpush.bf16.msra.mxu0 %v2111
    %2253 = vmatpush.bf16.msra.mxu0 %v2107
    %2254 = vmatpush.bf16.msra.mxu0 %v2103
    %2255 = vmatpush.bf16.msra.mxu0 %v2099
    %2256 = vmatpush.bf16.msra.mxu0 %v2095
    %2257 = vmatpush.bf16.msra.mxu0 %v2091
    %2258 = vmatmul.bf16.gmra.mxu0 %v1800
    %v2259 = vpop.f32.mrf.mxu0
    %v2260 = vadd.f32 %v2247, %v2259
    %v2261 = vpop.f32.mrf.mxu0
    %2262 = vdwg.mxu0
    %2263 = vmatpush.bf16.msra.mxu0 %v2088
    %2264 = vmatpush.bf16.msra.mxu0 %v2084
    %2265 = vmatpush.bf16.msra.mxu0 %v2080
    %2266 = vmatpush.bf16.msra.mxu0 %v2076
    %2267 = vmatpush.bf16.msra.mxu0 %v2072
    %2268 = vmatpush.bf16.msra.mxu0 %v2068
    %2269 = vmatpush.bf16.msra.mxu0 %v2064
    %2270 = vmatpush.bf16.msra.mxu0 %v2060
    %2271 = vmatmul.bf16.gmra.mxu0 %v1799
    %v2272 = vpop.f32.mrf.mxu0
    %v2273 = vadd.f32 0.0, %v2272
    %v2274 = vpop.f32.mrf.mxu0
    %2275 = vdwg.mxu0
    %2276 = vmatpush.bf16.msra.mxu0 %v2120
    %2277 = vmatpush.bf16.msra.mxu0 %v2116
    %2278 = vmatpush.bf16.msra.mxu0 %v2112
    %2279 = vmatpush.bf16.msra.mxu0 %v2108
    %2280 = vmatpush.bf16.msra.mxu0 %v2104
    %2281 = vmatpush.bf16.msra.mxu0 %v2100
    %2282 = vmatpush.bf16.msra.mxu0 %v2096
    %2283 = vmatpush.bf16.msra.mxu0 %v2092
    %2284 = vmatmul.bf16.gmra.mxu0 %v1800
    %v2285 = vpop.f32.mrf.mxu0
    %v2286 = vadd.f32 %v2273, %v2285
    %v2287 = vpop.f32.mrf.mxu0
    %2288 = vdwg.mxu0
    %v2289 = vadd.f32 %v1745, %v2208
    %v2290 = vadd.f32 %v1746, %v2234
    %v2291 = vadd.f32 %v1747, %v2260
    %v2292 = vadd.f32 %v1748, %v2286
    %v2293 = vld [vmem:[#allocation9] sm:$0xf]
    %v2295 = vperm.slane %v2293, 0
    %v2296 = vperm.slane %v2293, 1
    %v2297 = vperm.slane %v2293, 2
    %v2298 = vperm.slane %v2293, 3
    %v2303 = vadd.f32 %v2289, %v2295
    %v2304 = vadd.f32 %v2290, %v2296
    %v2305 = vadd.f32 %v2291, %v2297
    %v2306 = vadd.f32 %v2292, %v2298
    %v2307 = vmax.f32 %v2303, 0.0
    %v2308 = vmax.f32 %v2304, 0.0
    %v2309 = vmax.f32 %v2305, 0.0
    %v2310 = vmax.f32 %v2306, 0.0
    %v2311 = vpack.c.bf16 %v2307, %v2307
    %v2312 = vpack.c.bf16 %v2308, %v2308
    %v2313 = vpack.c.bf16 %v2309, %v2309
    %v2314 = vpack.c.bf16 %v2310, %v2310
    %v2315 = vld [vmem:[#allocation10] sm:$0xf]
    %v2316 = vld [vmem:[#allocation10 + $0x4] sm:$0xf]
    %v2317 = vld [vmem:[#allocation10 + $0x8] sm:$0xf]
    %v2318 = vld [vmem:[#allocation10 + $0xc] sm:$0xf]
    %v2319 = vld [vmem:[#allocation10 + $0x10] sm:$0xf]
    %v2320 = vld [vmem:[#allocation10 + $0x14] sm:$0xf]
    %v2321 = vld [vmem:[#allocation10 + $0x18] sm:$0xf]
    %v2322 = vld [vmem:[#allocation10 + $0x1c] sm:$0xf]
    %v2323 = vld [vmem:[#allocation10 + $0x20] sm:$0xf]
    %v2324 = vld [vmem:[#allocation10 + $0x24] sm:$0xf]
    %v2325 = vld [vmem:[#allocation10 + $0x28] sm:$0xf]
    %v2326 = vld [vmem:[#allocation10 + $0x2c] sm:$0xf]
    %v2327 = vld [vmem:[#allocation10 + $0x30] sm:$0xf]
    %v2328 = vld [vmem:[#allocation10 + $0x34] sm:$0xf]
    %v2329 = vld [vmem:[#allocation10 + $0x38] sm:$0xf]
    %v2330 = vld [vmem:[#allocation10 + $0x3c] sm:$0xf]
    %v2331 = vld [vmem:[#allocation10 + $0x40] sm:$0xf]
    %v2332 = vld [vmem:[#allocation10 + $0x44] sm:$0xf]
    %v2333 = vld [vmem:[#allocation10 + $0x48] sm:$0xf]
    %v2334 = vld [vmem:[#allocation10 + $0x4c] sm:$0xf]
    %v2335 = vld [vmem:[#allocation10 + $0x50] sm:$0xf]
    %v2336 = vld [vmem:[#allocation10 + $0x54] sm:$0xf]
    %v2337 = vld [vmem:[#allocation10 + $0x58] sm:$0xf]
    %v2338 = vld [vmem:[#allocation10 + $0x5c] sm:$0xf]
    %v2339 = vld [vmem:[#allocation10 + $0x60] sm:$0xf]
    %v2340 = vld [vmem:[#allocation10 + $0x64] sm:$0xf]
    %v2341 = vld [vmem:[#allocation10 + $0x68] sm:$0xf]
    %v2342 = vld [vmem:[#allocation10 + $0x6c] sm:$0xf]
    %v2343 = vld [vmem:[#allocation10 + $0x70] sm:$0xf]
    %v2344 = vld [vmem:[#allocation10 + $0x74] sm:$0xf]
    %v2345 = vld [vmem:[#allocation10 + $0x78] sm:$0xf]
    %v2346 = vld [vmem:[#allocation10 + $0x7c] sm:$0xf]
    %v2347 = vld [vmem:[#allocation10 + $0x80] sm:$0xf]
    %v2348 = vld [vmem:[#allocation10 + $0x84] sm:$0xf]
    %v2349 = vld [vmem:[#allocation10 + $0x88] sm:$0xf]
    %v2350 = vld [vmem:[#allocation10 + $0x8c] sm:$0xf]
    %v2351 = vld [vmem:[#allocation10 + $0x90] sm:$0xf]
    %v2352 = vld [vmem:[#allocation10 + $0x94] sm:$0xf]
    %v2353 = vld [vmem:[#allocation10 + $0x98] sm:$0xf]
    %v2354 = vld [vmem:[#allocation10 + $0x9c] sm:$0xf]
    %v2355 = vld [vmem:[#allocation10 + $0xa0] sm:$0xf]
    %v2356 = vld [vmem:[#allocation10 + $0xa4] sm:$0xf]
    %v2357 = vld [vmem:[#allocation10 + $0xa8] sm:$0xf]
    %v2358 = vld [vmem:[#allocation10 + $0xac] sm:$0xf]
    %v2359 = vld [vmem:[#allocation10 + $0xb0] sm:$0xf]
    %v2360 = vld [vmem:[#allocation10 + $0xb4] sm:$0xf]
    %v2361 = vld [vmem:[#allocation10 + $0xb8] sm:$0xf]
    %v2362 = vld [vmem:[#allocation10 + $0xbc] sm:$0xf]
    %v2363 = vld [vmem:[#allocation10 + $0xc0] sm:$0xf]
    %v2364 = vld [vmem:[#allocation10 + $0xc4] sm:$0xf]
    %v2365 = vld [vmem:[#allocation10 + $0xc8] sm:$0xf]
    %v2366 = vld [vmem:[#allocation10 + $0xcc] sm:$0xf]
    %v2367 = vld [vmem:[#allocation10 + $0xd0] sm:$0xf]
    %v2368 = vld [vmem:[#allocation10 + $0xd4] sm:$0xf]
    %v2369 = vld [vmem:[#allocation10 + $0xd8] sm:$0xf]
    %v2370 = vld [vmem:[#allocation10 + $0xdc] sm:$0xf]
    %v2371 = vld [vmem:[#allocation10 + $0xe0] sm:$0xf]
    %v2372 = vld [vmem:[#allocation10 + $0xe4] sm:$0xf]
    %v2373 = vld [vmem:[#allocation10 + $0xe8] sm:$0xf]
    %v2374 = vld [vmem:[#allocation10 + $0xec] sm:$0xf]
    %v2375 = vld [vmem:[#allocation10 + $0xf0] sm:$0xf]
    %v2376 = vld [vmem:[#allocation10 + $0xf4] sm:$0xf]
    %v2377 = vld [vmem:[#allocation10 + $0xf8] sm:$0xf]
    %v2378 = vld [vmem:[#allocation10 + $0xfc] sm:$0xf]
    %v2379 = vld [vmem:[%s6] sm:$0x1]
    %v2381 = vperm.slane %v2379, 0
    %v2447 = vunpack.c.l.b16 %v2315
    %v2448 = vunpack.c.l.b16 %v2316
    %v2449 = vunpack.c.l.b16 %v2317
    %v2450 = vunpack.c.l.b16 %v2318
    %v2451 = vunpack.c.l.b16 %v2319
    %v2452 = vunpack.c.l.b16 %v2320
    %v2453 = vunpack.c.l.b16 %v2321
    %v2454 = vunpack.c.l.b16 %v2322
    %v2455 = vunpack.c.l.b16 %v2323
    %v2456 = vunpack.c.l.b16 %v2324
    %v2457 = vunpack.c.l.b16 %v2325
    %v2458 = vunpack.c.l.b16 %v2326
    %v2459 = vunpack.c.l.b16 %v2327
    %v2460 = vunpack.c.l.b16 %v2328
    %v2461 = vunpack.c.l.b16 %v2329
    %v2462 = vunpack.c.l.b16 %v2330
    %v2463 = vunpack.c.l.b16 %v2331
    %v2464 = vunpack.c.l.b16 %v2332
    %v2465 = vunpack.c.l.b16 %v2333
    %v2466 = vunpack.c.l.b16 %v2334
    %v2467 = vunpack.c.l.b16 %v2335
    %v2468 = vunpack.c.l.b16 %v2336
    %v2469 = vunpack.c.l.b16 %v2337
    %v2470 = vunpack.c.l.b16 %v2338
    %v2471 = vunpack.c.l.b16 %v2339
    %v2472 = vunpack.c.l.b16 %v2340
    %v2473 = vunpack.c.l.b16 %v2341
    %v2474 = vunpack.c.l.b16 %v2342
    %v2475 = vunpack.c.l.b16 %v2343
    %v2476 = vunpack.c.l.b16 %v2344
    %v2477 = vunpack.c.l.b16 %v2345
    %v2478 = vunpack.c.l.b16 %v2346
    %v2479 = vunpack.c.l.b16 %v2347
    %v2480 = vunpack.c.l.b16 %v2348
    %v2481 = vunpack.c.l.b16 %v2349
    %v2482 = vunpack.c.l.b16 %v2350
    %v2483 = vunpack.c.l.b16 %v2351
    %v2484 = vunpack.c.l.b16 %v2352
    %v2485 = vunpack.c.l.b16 %v2353
    %v2486 = vunpack.c.l.b16 %v2354
    %v2487 = vunpack.c.l.b16 %v2355
    %v2488 = vunpack.c.l.b16 %v2356
    %v2489 = vunpack.c.l.b16 %v2357
    %v2490 = vunpack.c.l.b16 %v2358
    %v2491 = vunpack.c.l.b16 %v2359
    %v2492 = vunpack.c.l.b16 %v2360
    %v2493 = vunpack.c.l.b16 %v2361
    %v2494 = vunpack.c.l.b16 %v2362
    %v2495 = vunpack.c.l.b16 %v2363
    %v2496 = vunpack.c.l.b16 %v2364
    %v2497 = vunpack.c.l.b16 %v2365
    %v2498 = vunpack.c.l.b16 %v2366
    %v2499 = vunpack.c.l.b16 %v2367
    %v2500 = vunpack.c.l.b16 %v2368
    %v2501 = vunpack.c.l.b16 %v2369
    %v2502 = vunpack.c.l.b16 %v2370
    %v2503 = vunpack.c.l.b16 %v2371
    %v2504 = vunpack.c.l.b16 %v2372
    %v2505 = vunpack.c.l.b16 %v2373
    %v2506 = vunpack.c.l.b16 %v2374
    %v2507 = vunpack.c.l.b16 %v2375
    %v2508 = vunpack.c.l.b16 %v2376
    %v2509 = vunpack.c.l.b16 %v2377
    %v2510 = vunpack.c.l.b16 %v2378
    %v2511 = vpack.c.b16 %v2448, %v2447
    %v2512 = vpack.c.b16 %v2450, %v2449
    %v2513 = vpack.c.b16 %v2452, %v2451
    %v2514 = vpack.c.b16 %v2454, %v2453
    %v2515 = vpack.c.b16 %v2456, %v2455
    %v2516 = vpack.c.b16 %v2458, %v2457
    %v2517 = vpack.c.b16 %v2460, %v2459
    %v2518 = vpack.c.b16 %v2462, %v2461
    %v2519 = vpack.c.b16 %v2464, %v2463
    %v2520 = vpack.c.b16 %v2466, %v2465
    %v2521 = vpack.c.b16 %v2468, %v2467
    %v2522 = vpack.c.b16 %v2470, %v2469
    %v2523 = vpack.c.b16 %v2472, %v2471
    %v2524 = vpack.c.b16 %v2474, %v2473
    %v2525 = vpack.c.b16 %v2476, %v2475
    %v2526 = vpack.c.b16 %v2478, %v2477
    %v2527 = vpack.c.b16 %v2480, %v2479
    %v2528 = vpack.c.b16 %v2482, %v2481
    %v2529 = vpack.c.b16 %v2484, %v2483
    %v2530 = vpack.c.b16 %v2486, %v2485
    %v2531 = vpack.c.b16 %v2488, %v2487
    %v2532 = vpack.c.b16 %v2490, %v2489
    %v2533 = vpack.c.b16 %v2492, %v2491
    %v2534 = vpack.c.b16 %v2494, %v2493
    %v2535 = vpack.c.b16 %v2496, %v2495
    %v2536 = vpack.c.b16 %v2498, %v2497
    %v2537 = vpack.c.b16 %v2500, %v2499
    %v2538 = vpack.c.b16 %v2502, %v2501
    %v2539 = vpack.c.b16 %v2504, %v2503
    %v2540 = vpack.c.b16 %v2506, %v2505
    %v2541 = vpack.c.b16 %v2508, %v2507
    %v2542 = vpack.c.b16 %v2510, %v2509
    %2575 = vmatpush.bf16.msra.mxu0 %v2518
    %2576 = vmatpush.bf16.msra.mxu0 %v2517
    %2577 = vmatpush.bf16.msra.mxu0 %v2516
    %2578 = vmatpush.bf16.msra.mxu0 %v2515
    %2579 = vmatpush.bf16.msra.mxu0 %v2514
    %2580 = vmatpush.bf16.msra.mxu0 %v2513
    %2581 = vmatpush.bf16.msra.mxu0 %v2512
    %2582 = vmatpush.bf16.msra.mxu0 %v2511
    %2583 = vmatmul.bf16.gmra.mxu0 %v2311
    %v2584 = vpop.f32.mrf.mxu0
    %v2585 = vadd.f32 %v2381, %v2584
    %v2586 = vpop.f32.mrf.mxu0
    %2587 = vdwg.mxu0
    %2588 = vmatpush.bf16.msra.mxu0 %v2526
    %2589 = vmatpush.bf16.msra.mxu0 %v2525
    %2590 = vmatpush.bf16.msra.mxu0 %v2524
    %2591 = vmatpush.bf16.msra.mxu0 %v2523
    %2592 = vmatpush.bf16.msra.mxu0 %v2522
    %2593 = vmatpush.bf16.msra.mxu0 %v2521
    %2594 = vmatpush.bf16.msra.mxu0 %v2520
    %2595 = vmatpush.bf16.msra.mxu0 %v2519
    %2596 = vmatmul.bf16.gmra.mxu0 %v2312
    %v2597 = vpop.f32.mrf.mxu0
    %v2598 = vadd.f32 %v2585, %v2597
    %v2599 = vpop.f32.mrf.mxu0
    %2600 = vdwg.mxu0
    %2601 = vmatpush.bf16.msra.mxu0 %v2534
    %2602 = vmatpush.bf16.msra.mxu0 %v2533
    %2603 = vmatpush.bf16.msra.mxu0 %v2532
    %2604 = vmatpush.bf16.msra.mxu0 %v2531
    %2605 = vmatpush.bf16.msra.mxu0 %v2530
    %2606 = vmatpush.bf16.msra.mxu0 %v2529
    %2607 = vmatpush.bf16.msra.mxu0 %v2528
    %2608 = vmatpush.bf16.msra.mxu0 %v2527
    %2609 = vmatmul.bf16.gmra.mxu0 %v2313
    %v2610 = vpop.f32.mrf.mxu0
    %v2611 = vadd.f32 %v2598, %v2610
    %v2612 = vpop.f32.mrf.mxu0
    %2613 = vdwg.mxu0
    %2614 = vmatpush.bf16.msra.mxu0 %v2542
    %2615 = vmatpush.bf16.msra.mxu0 %v2541
    %2616 = vmatpush.bf16.msra.mxu0 %v2540
    %2617 = vmatpush.bf16.msra.mxu0 %v2539
    %2618 = vmatpush.bf16.msra.mxu0 %v2538
    %2619 = vmatpush.bf16.msra.mxu0 %v2537
    %2620 = vmatpush.bf16.msra.mxu0 %v2536
    %2621 = vmatpush.bf16.msra.mxu0 %v2535
    %2622 = vmatmul.bf16.gmra.mxu0 %v2314
    %v2623 = vpop.f32.mrf.mxu0
    %v2624 = vadd.f32 %v2611, %v2623
    %v2625 = vpop.f32.mrf.mxu0
    %2626 = vdwg.mxu0
    %vm2627 = vcmask 23552
    %2628 = vst.msk [vmem:[%s7] sm:$0xff] %vm2627, %v2624
    // Predicated region
    $region54: #{example_nn_forward.1} parent=1 // pred_check
      _
    $region55: #{example_nn_forward.1} parent=1 // pred_check_branch
      %2630 = sbr.rel (0) target = $region57
    $region56: #{example_nn_forward.1} parent=1 // pred_region
      _
    $region57: #{example_nn_forward.1} parent=1 // pred_fallthru
      _
    // Predicated region
    $region58: #{example_nn_forward.1} parent=1 // pred_check
      _
    $region59: #{example_nn_forward.1} parent=1 // pred_check_branch
      %2632 = sbr.rel (0) target = $region61
    $region60: #{example_nn_forward.1} parent=1 // pred_region
      _
    $region61: #{example_nn_forward.1} parent=1 // pred_fallthru
      _
    %2633 = vsyncpa [#allocation3], 1
    %2634 = vsyncpa [#allocation5], 1
    %2635 = vsyncpa [#allocation8], 1
    %2636 = vsyncpa [#allocation11], 1

</llo_original>
